<compile_context>
chip_gen: v6e
topology: v6e:2x2x1
jax: 0.10.0
libtpu: 0.0.40
codegen_flags: <defaults>
</compile_context>

<pallas_src>
import functools

import jax
import jax.numpy as jnp
from jax.experimental import pallas as pl
from jax.experimental.pallas import tpu as pltpu


def _pick_tile_n(n, row_bytes):
    """Largest multiple-of-8 divisor of n whose double-buffered input tile stays
    well inside VMEM on every generation (v7x: 64 MiB/TC)."""
    if n % 8 != 0:
        return n                        # full extent (block == array dims is legal)
    budget_bytes = 4 * 1024 * 1024      # per input buffer; x2 for double buffering
    cap_rows = max(8, min(512, budget_bytes // max(row_bytes, 1)))
    best = 8
    for cand in range(8, n + 1, 8):
        if cand <= cap_rows and n % cand == 0:
            best = cand
    return best


# ---------------------------------------------------------------------------
# Fused kernel:
#   stage 1 (per tile of N=B*T rows): folded pool+projection matmul, then the
#     hoisted LSTM input projection -> gate pre-activations into VMEM scratch.
#   stage 2 (last grid step): LSTM recurrence + temporal mean + LayerNorm
#     + LeakyReLU + Linear head.
# ---------------------------------------------------------------------------
def fused_kernel(x_ref, wpool_ref, bproj_ref, wih_ref, whh_ref, bgates_ref,
                 gamma_ref, beta_ref, wl_ref, bl_ref,
                 out_ref, gates_scratch,
                 *, batch, seq_len, hidden_dim, tile_n):
    i = pl.program_id(0)
    n_tiles = pl.num_programs(0)
    B, T, H = batch, seq_len, hidden_dim

    # ---- Stage 1: image tile (bf16) -> latent -> gate pre-activations -------
    feats = jnp.dot(x_ref[...], wpool_ref[...],
                    preferred_element_type=jnp.float32) + bproj_ref[...]
    gates_in = (jnp.dot(feats, wih_ref[...], preferred_element_type=jnp.float32)
                + bgates_ref[...])
    row0 = pl.multiple_of(i * tile_n, tile_n)
    gates_scratch[pl.ds(row0, tile_n), :] = gates_in

    # ---- Stage 2: recurrence + head on the last grid step -------------------
    @pl.when(i == n_tiles - 1)
    def _():
        # scratch rows are (b-major, t-minor): row = b*T + t; the reshape keeps
        # the (8,128) sublane tiling intact (T is the sublane group here).
        gx = gates_scratch[...].reshape(B, T, 4 * H)
        whh = whh_ref[...]

        h = jnp.zeros((B, H), jnp.float32)
        c = jnp.zeros((B, H), jnp.float32)
        acc = jnp.zeros((B, H), jnp.float32)
        # T is small & static and the recurrence is strictly serial: unrolled
        # loop; only the small h @ W_hh product sits on the critical path.
        for t in range(T):
            gates = gx[:, t, :] + jnp.dot(h, whh,
                                          preferred_element_type=jnp.float32)
            # PyTorch gate order: i, f, g, o. Sigmoid/tanh per gate slice only.
            i_g = jax.nn.sigmoid(gates[:, 0 * H:1 * H])
            f_g = jax.nn.sigmoid(gates[:, 1 * H:2 * H])
            g_g = jnp.tanh(gates[:, 2 * H:3 * H])
            o_g = jax.nn.sigmoid(gates[:, 3 * H:4 * H])
            c = f_g * c + i_g * g_g
            h = o_g * jnp.tanh(c)
            acc = acc + h

        # torch.mean(lstm_out, dim=1)
        mean_h = acc * jnp.float32(1.0 / T)

        # nn.LayerNorm(H): eps=1e-5, biased variance
        mu = jnp.mean(mean_h, axis=-1, keepdims=True)
        var = jnp.mean((mean_h - mu) ** 2, axis=-1, keepdims=True)
        normed = (mean_h - mu) * jax.lax.rsqrt(var + 1e-5)
        normed = normed * gamma_ref[...] + beta_ref[...]

        # nn.LeakyReLU() slope 0.01; nn.Dropout(0.4) is identity at inference.
        act = jnp.where(normed >= 0, normed, 0.01 * normed)

        # nn.Linear(H, num_classes)
        out_ref[...] = (jnp.dot(act, wl_ref[...],
                                preferred_element_type=jnp.float32) + bl_ref[...])


# ---------------------------------------------------------------------------
# Parameters (CNN proxy + LSTM + LayerNorm + Linear)
# ---------------------------------------------------------------------------
def init_params(key, c_in, latent_dim, hidden_dim, num_classes):
    ks = jax.random.split(key, 6)
    scale = 0.1
    return {
        "w_proj": scale * jax.random.normal(ks[0], (c_in, latent_dim), jnp.float32),
        "b_proj": jnp.zeros((1, latent_dim), jnp.float32),
        "w_ih": scale * jax.random.normal(ks[1], (latent_dim, 4 * hidden_dim), jnp.float32),
        "w_hh": scale * jax.random.normal(ks[2], (hidden_dim, 4 * hidden_dim), jnp.float32),
        "b_ih": scale * jax.random.normal(ks[3], (1, 4 * hidden_dim), jnp.float32),
        "b_hh": jnp.zeros((1, 4 * hidden_dim), jnp.float32),
        "gamma": jnp.ones((1, hidden_dim), jnp.float32),
        "beta": jnp.zeros((1, hidden_dim), jnp.float32),
        "w_lin": scale * jax.random.normal(ks[4], (hidden_dim, num_classes), jnp.float32),
        "b_lin": scale * jax.random.normal(ks[5], (1, num_classes), jnp.float32),
    }


# ---------------------------------------------------------------------------
# Wrapper
# ---------------------------------------------------------------------------
@functools.partial(jax.jit, static_argnames=("hidden_dim", "num_classes"))
def face_classifier_lstm(x, params, *, hidden_dim, num_classes):
    # x.dim() == 4 -> unsqueeze seq dim (matches the PyTorch forward)
    if x.ndim == 4:
        x = x[:, None]
    B, T, C, H, W = x.shape
    HW = H * W
    CHW = C * HW
    N = B * T
    D = params["w_proj"].shape[1]
    Hd = hidden_dim

    # Fold AdaptiveAvgPool2d(1) into the channel projection; run the (HBM
    # bandwidth bound) image path in bf16 — accumulation is f32 in-kernel.
    w_pool = (jnp.repeat(params["w_proj"], HW, axis=0)
              * jnp.float32(1.0 / HW)).astype(jnp.bfloat16)      # (C*HW, D)
    x_flat = x.reshape(N, CHW).astype(jnp.bfloat16)              # rows: b-major, t-minor
    b_gates = params["b_ih"] + params["b_hh"]                    # LSTM adds both biases

    tile_n = _pick_tile_n(N, CHW * 2)
    n_tiles = N // tile_n

    def _const(shape):
        return pl.BlockSpec(shape, lambda i: (0, 0))

    in_specs = [
        pl.BlockSpec((tile_n, CHW), lambda i: (i, 0)),   # image tile (pipelined DMA)
        _const((CHW, D)),                                # w_pool (bf16)
        _const((1, D)),                                  # b_proj
        _const((D, 4 * Hd)),                             # w_ih
        _const((Hd, 4 * Hd)),                            # w_hh
        _const((1, 4 * Hd)),                             # b_ih + b_hh
        _const((1, Hd)),                                 # gamma
        _const((1, Hd)),                                 # beta
        _const((Hd, num_classes)),                       # w_lin
        _const((1, num_classes)),                        # b_lin
    ]
    out_specs = pl.BlockSpec((B, num_classes), lambda i: (0, 0))

    flops = (2 * N * CHW * D + 2 * N * D * 4 * Hd
             + T * 2 * B * Hd * 4 * Hd + 2 * B * Hd * num_classes)
    transcendentals = T * B * (4 * Hd + Hd) + B
    bytes_accessed = (x_flat.size * 2 + w_pool.size * 2
                      + sum(int(v.size) * 4 for v in params.values())
                      + B * num_classes * 4)

    out = pl.pallas_call(
        functools.partial(fused_kernel, batch=B, seq_len=T,
                          hidden_dim=Hd, tile_n=tile_n),
        out_shape=jax.ShapeDtypeStruct((B, num_classes), jnp.float32),
        grid_spec=pltpu.PrefetchScalarGridSpec(
            num_scalar_prefetch=0,
            grid=(n_tiles,),
            in_specs=in_specs,
            out_specs=out_specs,
            scratch_shapes=[pltpu.VMEM((N, 4 * Hd), jnp.float32)],
        ),
        compiler_params=pltpu.CompilerParams(
            # gate scratch is carried across the grid and the output is written
            # on the last step only -> N axis must be "arbitrary".
            dimension_semantics=("arbitrary",),
            vmem_limit_bytes=32 * 1024 * 1024,
        ),
        cost_estimate=pl.CostEstimate(
            flops=int(flops),
            transcendentals=int(transcendentals),
            bytes_accessed=int(bytes_accessed),
        ),
    )(
        x_flat, w_pool, params["b_proj"],
        params["w_ih"], params["w_hh"], b_gates,
        params["gamma"], params["beta"],
        params["w_lin"], params["b_lin"],
    )
    return out


if __name__ == "__main__":
    # Small shapes consistent with the module's forward:
    #   batch=2, seq=8, channels=4, spatial=16x16, latent_dim=128, hidden_dim=32
    B, T, C, H, W = 2, 8, 4, 16, 16
    LATENT_DIM = 128
    HIDDEN_DIM = 32
    NUM_CLASSES = 2

    key = jax.random.PRNGKey(0)
    k_x, k_p = jax.random.split(key)
    x = jax.random.normal(k_x, (B, T, C, H, W), jnp.float32)
    params = init_params(k_p, C, LATENT_DIM, HIDDEN_DIM, NUM_CLASSES)

    out = face_classifier_lstm(x, params, hidden_dim=HIDDEN_DIM,
                               num_classes=NUM_CLASSES)
    out = jax.block_until_ready(out)
    assert out.shape == (B, NUM_CLASSES)
    assert bool(jnp.all(jnp.isfinite(out)))
    print("KERNEL_OK")
</pallas_src>

<mosaic_0001>
module attributes {stable_mosaic.version = 11 : i64} {
  func.func @fused_kernel(%arg0: i32, %arg1: memref<16x1024xbf16, #tpu.memory_space<vmem>>, %arg2: memref<1024x128xbf16, #tpu.memory_space<vmem>>, %arg3: memref<1x128xf32, #tpu.memory_space<vmem>>, %arg4: memref<128x128xf32, #tpu.memory_space<vmem>>, %arg5: memref<32x128xf32, #tpu.memory_space<vmem>>, %arg6: memref<1x128xf32, #tpu.memory_space<vmem>>, %arg7: memref<1x32xf32, #tpu.memory_space<vmem>>, %arg8: memref<1x32xf32, #tpu.memory_space<vmem>>, %arg9: memref<32x2xf32, #tpu.memory_space<vmem>>, %arg10: memref<1x2xf32, #tpu.memory_space<vmem>>, %arg11: memref<2x2xf32, #tpu.memory_space<vmem>>, %arg12: memref<16x128xf32, #tpu.memory_space<vmem>>) attributes {dimension_semantics = [#tpu.dimension_semantics<arbitrary>], iteration_bounds = array<i64: 1>, scalar_prefetch = 0 : i64, scratch_operands = 1 : i64, tpu.core_type = #tpu.core_type<tc>, window_params = [{transform_indices = @transform_0, window_bounds = array<i64: 16, 1024>}, {pipeline_mode = #tpu.pipeline_mode<synchronous>, transform_indices = @transform_1, window_bounds = array<i64: 1024, 128>}, {pipeline_mode = #tpu.pipeline_mode<synchronous>, transform_indices = @transform_2, window_bounds = array<i64: 1, 128>}, {pipeline_mode = #tpu.pipeline_mode<synchronous>, transform_indices = @transform_3, window_bounds = array<i64: 128, 128>}, {pipeline_mode = #tpu.pipeline_mode<synchronous>, transform_indices = @transform_4, window_bounds = array<i64: 32, 128>}, {pipeline_mode = #tpu.pipeline_mode<synchronous>, transform_indices = @transform_5, window_bounds = array<i64: 1, 128>}, {pipeline_mode = #tpu.pipeline_mode<synchronous>, transform_indices = @transform_6, window_bounds = array<i64: 1, 32>}, {pipeline_mode = #tpu.pipeline_mode<synchronous>, transform_indices = @transform_7, window_bounds = array<i64: 1, 32>}, {pipeline_mode = #tpu.pipeline_mode<synchronous>, transform_indices = @transform_8, window_bounds = array<i64: 32, 2>}, {pipeline_mode = #tpu.pipeline_mode<synchronous>, transform_indices = @transform_9, window_bounds = array<i64: 1, 2>}, {pipeline_mode = #tpu.pipeline_mode<synchronous>, transform_indices = @transform_10, window_bounds = array<i64: 2, 2>}]} {
    %c0 = arith.constant 0 : index
    %c0_0 = arith.constant 0 : index
    %0 = vector.load %arg1[%c0, %c0_0] : memref<16x1024xbf16, #tpu.memory_space<vmem>>, vector<16x1024xbf16>
    %c0_1 = arith.constant 0 : index
    %c0_2 = arith.constant 0 : index
    %1 = vector.load %arg2[%c0_1, %c0_2] : memref<1024x128xbf16, #tpu.memory_space<vmem>>, vector<1024x128xbf16>
    %cst = arith.constant dense<0.000000e+00> : vector<16x128xf32>
    %2 = tpu.matmul %0, %1, %cst {dimension_numbers = #tpu.dot_dimension_numbers<[1], [0], [0], [1], [0, 0, 1, 1], [], []>} : vector<16x1024xbf16>, vector<1024x128xbf16>, vector<16x128xf32> -> vector<16x128xf32>
    %c0_3 = arith.constant 0 : index
    %c0_4 = arith.constant 0 : index
    %3 = vector.load %arg3[%c0_3, %c0_4] : memref<1x128xf32, #tpu.memory_space<vmem>>, vector<1x128xf32>
    %4 = vector.broadcast %3 : vector<1x128xf32> to vector<16x128xf32>
    %5 = arith.addf %2, %4 : vector<16x128xf32>
    %c0_5 = arith.constant 0 : index
    %c0_6 = arith.constant 0 : index
    %6 = vector.load %arg4[%c0_5, %c0_6] : memref<128x128xf32, #tpu.memory_space<vmem>>, vector<128x128xf32>
    %cst_7 = arith.constant dense<0.000000e+00> : vector<16x128xf32>
    %7 = tpu.matmul %5, %6, %cst_7 {dimension_numbers = #tpu.dot_dimension_numbers<[1], [0], [0], [1], [0, 0, 1, 1], [], []>} : vector<16x128xf32>, vector<128x128xf32>, vector<16x128xf32> -> vector<16x128xf32>
    %c0_8 = arith.constant 0 : index
    %c0_9 = arith.constant 0 : index
    %8 = vector.load %arg6[%c0_8, %c0_9] : memref<1x128xf32, #tpu.memory_space<vmem>>, vector<1x128xf32>
    %9 = vector.broadcast %8 : vector<1x128xf32> to vector<16x128xf32>
    %10 = arith.addf %7, %9 : vector<16x128xf32>
    %c16_i32 = arith.constant 16 : i32
    %11 = arith.muli %arg0, %c16_i32 : i32
    %12 = tpu.assume_multiple %11, 16 : i32
    %13 = arith.index_cast %12 : i32 to index
    %c0_10 = arith.constant 0 : index
    %14 = vector.load %arg12[%13, %c0_10] : memref<16x128xf32, #tpu.memory_space<vmem>>, vector<16x128xf32>
    tpu.vector_store %arg12[%13, %c0_10], %10 {strides = array<i32>} : memref<16x128xf32, #tpu.memory_space<vmem>>, vector<16x128xf32>,
    %c0_i32 = arith.constant 0 : i32
    %15 = arith.cmpi eq, %arg0, %c0_i32 : i32
    %16 = arith.extui %15 : i1 to i32
    %c0_i32_11 = arith.constant 0 : i32
    %17 = arith.cmpi ne, %16, %c0_i32_11 : i32
    scf.if %17 {
      %c0_12 = arith.constant 0 : index
      %c0_13 = arith.constant 0 : index
      %18 = vector.load %arg12[%c0_12, %c0_13] : memref<16x128xf32, #tpu.memory_space<vmem>>, vector<16x128xf32>
      %19 = vector.shape_cast %18 : vector<16x128xf32> to vector<2x8x128xf32>
      %c0_14 = arith.constant 0 : index
      %c0_15 = arith.constant 0 : index
      %20 = vector.load %arg5[%c0_14, %c0_15] : memref<32x128xf32, #tpu.memory_space<vmem>>, vector<32x128xf32>
      %cst_16 = arith.constant 0.000000e+00 : f32
      %21 = vector.broadcast %cst_16 : f32 to vector<2x32xf32>
      %cst_17 = arith.constant 0.000000e+00 : f32
      %22 = vector.broadcast %cst_17 : f32 to vector<2x32xf32>
      %cst_18 = arith.constant 0.000000e+00 : f32
      %23 = vector.broadcast %cst_18 : f32 to vector<2x32xf32>
      %24 = vector.extract_strided_slice %19 {offsets = [0, 0, 0], sizes = [2, 1, 128], strides = [1, 1, 1]} : vector<2x8x128xf32> to vector<2x1x128xf32>
      %25 = vector.shape_cast %24 : vector<2x1x128xf32> to vector<2x128xf32>
      %cst_19 = arith.constant dense<0.000000e+00> : vector<2x128xf32>
      %26 = tpu.matmul %21, %20, %cst_19 {dimension_numbers = #tpu.dot_dimension_numbers<[1], [0], [0], [1], [0, 0, 1, 1], [], []>} : vector<2x32xf32>, vector<32x128xf32>, vector<2x128xf32> -> vector<2x128xf32>
      %27 = arith.addf %25, %26 : vector<2x128xf32>
      %28 = vector.extract_strided_slice %27 {offsets = [0, 0], sizes = [2, 32], strides = [1, 1]} : vector<2x128xf32> to vector<2x32xf32>
      %29 = arith.negf %28 : vector<2x32xf32>
      %30 = math.exp %29 : vector<2x32xf32>
      %cst_20 = arith.constant 1.000000e+00 : f32
      %31 = vector.broadcast %cst_20 : f32 to vector<2x32xf32>
      %32 = arith.addf %31, %30 : vector<2x32xf32>
      %33 = arith.divf %31, %32 : vector<2x32xf32>
      %34 = vector.extract_strided_slice %27 {offsets = [0, 32], sizes = [2, 32], strides = [1, 1]} : vector<2x128xf32> to vector<2x32xf32>
      %35 = arith.negf %34 : vector<2x32xf32>
      %36 = math.exp %35 : vector<2x32xf32>
      %cst_21 = arith.constant 1.000000e+00 : f32
      %37 = vector.broadcast %cst_21 : f32 to vector<2x32xf32>
      %38 = arith.addf %37, %36 : vector<2x32xf32>
      %39 = arith.divf %37, %38 : vector<2x32xf32>
      %40 = vector.extract_strided_slice %27 {offsets = [0, 64], sizes = [2, 32], strides = [1, 1]} : vector<2x128xf32> to vector<2x32xf32>
      %41 = math.tanh %40 : vector<2x32xf32>
      %42 = vector.extract_strided_slice %27 {offsets = [0, 96], sizes = [2, 32], strides = [1, 1]} : vector<2x128xf32> to vector<2x32xf32>
      %43 = arith.negf %42 : vector<2x32xf32>
      %44 = math.exp %43 : vector<2x32xf32>
      %cst_22 = arith.constant 1.000000e+00 : f32
      %45 = vector.broadcast %cst_22 : f32 to vector<2x32xf32>
      %46 = arith.addf %45, %44 : vector<2x32xf32>
      %47 = arith.divf %45, %46 : vector<2x32xf32>
      %48 = arith.mulf %39, %22 : vector<2x32xf32>
      %49 = arith.mulf %33, %41 : vector<2x32xf32>
      %50 = arith.addf %48, %49 : vector<2x32xf32>
      %51 = math.tanh %50 : vector<2x32xf32>
      %52 = arith.mulf %47, %51 : vector<2x32xf32>
      %53 = arith.addf %23, %52 : vector<2x32xf32>
      %54 = vector.extract_strided_slice %19 {offsets = [0, 1, 0], sizes = [2, 1, 128], strides = [1, 1, 1]} : vector<2x8x128xf32> to vector<2x1x128xf32>
      %55 = vector.shape_cast %54 : vector<2x1x128xf32> to vector<2x128xf32>
      %cst_23 = arith.constant dense<0.000000e+00> : vector<2x128xf32>
      %56 = tpu.matmul %52, %20, %cst_23 {dimension_numbers = #tpu.dot_dimension_numbers<[1], [0], [0], [1], [0, 0, 1, 1], [], []>} : vector<2x32xf32>, vector<32x128xf32>, vector<2x128xf32> -> vector<2x128xf32>
      %57 = arith.addf %55, %56 : vector<2x128xf32>
      %58 = vector.extract_strided_slice %57 {offsets = [0, 0], sizes = [2, 32], strides = [1, 1]} : vector<2x128xf32> to vector<2x32xf32>
      %59 = arith.negf %58 : vector<2x32xf32>
      %60 = math.exp %59 : vector<2x32xf32>
      %cst_24 = arith.constant 1.000000e+00 : f32
      %61 = vector.broadcast %cst_24 : f32 to vector<2x32xf32>
      %62 = arith.addf %61, %60 : vector<2x32xf32>
      %63 = arith.divf %61, %62 : vector<2x32xf32>
      %64 = vector.extract_strided_slice %57 {offsets = [0, 32], sizes = [2, 32], strides = [1, 1]} : vector<2x128xf32> to vector<2x32xf32>
      %65 = arith.negf %64 : vector<2x32xf32>
      %66 = math.exp %65 : vector<2x32xf32>
      %cst_25 = arith.constant 1.000000e+00 : f32
      %67 = vector.broadcast %cst_25 : f32 to vector<2x32xf32>
      %68 = arith.addf %67, %66 : vector<2x32xf32>
      %69 = arith.divf %67, %68 : vector<2x32xf32>
      %70 = vector.extract_strided_slice %57 {offsets = [0, 64], sizes = [2, 32], strides = [1, 1]} : vector<2x128xf32> to vector<2x32xf32>
      %71 = math.tanh %70 : vector<2x32xf32>
      %72 = vector.extract_strided_slice %57 {offsets = [0, 96], sizes = [2, 32], strides = [1, 1]} : vector<2x128xf32> to vector<2x32xf32>
      %73 = arith.negf %72 : vector<2x32xf32>
      %74 = math.exp %73 : vector<2x32xf32>
      %cst_26 = arith.constant 1.000000e+00 : f32
      %75 = vector.broadcast %cst_26 : f32 to vector<2x32xf32>
      %76 = arith.addf %75, %74 : vector<2x32xf32>
      %77 = arith.divf %75, %76 : vector<2x32xf32>
      %78 = arith.mulf %69, %50 : vector<2x32xf32>
      %79 = arith.mulf %63, %71 : vector<2x32xf32>
      %80 = arith.addf %78, %79 : vector<2x32xf32>
      %81 = math.tanh %80 : vector<2x32xf32>
      %82 = arith.mulf %77, %81 : vector<2x32xf32>
      %83 = arith.addf %53, %82 : vector<2x32xf32>
      %84 = vector.extract_strided_slice %19 {offsets = [0, 2, 0], sizes = [2, 1, 128], strides = [1, 1, 1]} : vector<2x8x128xf32> to vector<2x1x128xf32>
      %85 = vector.shape_cast %84 : vector<2x1x128xf32> to vector<2x128xf32>
      %cst_27 = arith.constant dense<0.000000e+00> : vector<2x128xf32>
      %86 = tpu.matmul %82, %20, %cst_27 {dimension_numbers = #tpu.dot_dimension_numbers<[1], [0], [0], [1], [0, 0, 1, 1], [], []>} : vector<2x32xf32>, vector<32x128xf32>, vector<2x128xf32> -> vector<2x128xf32>
      %87 = arith.addf %85, %86 : vector<2x128xf32>
      %88 = vector.extract_strided_slice %87 {offsets = [0, 0], sizes = [2, 32], strides = [1, 1]} : vector<2x128xf32> to vector<2x32xf32>
      %89 = arith.negf %88 : vector<2x32xf32>
      %90 = math.exp %89 : vector<2x32xf32>
      %cst_28 = arith.constant 1.000000e+00 : f32
      %91 = vector.broadcast %cst_28 : f32 to vector<2x32xf32>
      %92 = arith.addf %91, %90 : vector<2x32xf32>
      %93 = arith.divf %91, %92 : vector<2x32xf32>
      %94 = vector.extract_strided_slice %87 {offsets = [0, 32], sizes = [2, 32], strides = [1, 1]} : vector<2x128xf32> to vector<2x32xf32>
      %95 = arith.negf %94 : vector<2x32xf32>
      %96 = math.exp %95 : vector<2x32xf32>
      %cst_29 = arith.constant 1.000000e+00 : f32
      %97 = vector.broadcast %cst_29 : f32 to vector<2x32xf32>
      %98 = arith.addf %97, %96 : vector<2x32xf32>
      %99 = arith.divf %97, %98 : vector<2x32xf32>
      %100 = vector.extract_strided_slice %87 {offsets = [0, 64], sizes = [2, 32], strides = [1, 1]} : vector<2x128xf32> to vector<2x32xf32>
      %101 = math.tanh %100 : vector<2x32xf32>
      %102 = vector.extract_strided_slice %87 {offsets = [0, 96], sizes = [2, 32], strides = [1, 1]} : vector<2x128xf32> to vector<2x32xf32>
      %103 = arith.negf %102 : vector<2x32xf32>
      %104 = math.exp %103 : vector<2x32xf32>
      %cst_30 = arith.constant 1.000000e+00 : f32
      %105 = vector.broadcast %cst_30 : f32 to vector<2x32xf32>
      %106 = arith.addf %105, %104 : vector<2x32xf32>
      %107 = arith.divf %105, %106 : vector<2x32xf32>
      %108 = arith.mulf %99, %80 : vector<2x32xf32>
      %109 = arith.mulf %93, %101 : vector<2x32xf32>
      %110 = arith.addf %108, %109 : vector<2x32xf32>
      %111 = math.tanh %110 : vector<2x32xf32>
      %112 = arith.mulf %107, %111 : vector<2x32xf32>
      %113 = arith.addf %83, %112 : vector<2x32xf32>
      %114 = vector.extract_strided_slice %19 {offsets = [0, 3, 0], sizes = [2, 1, 128], strides = [1, 1, 1]} : vector<2x8x128xf32> to vector<2x1x128xf32>
      %115 = vector.shape_cast %114 : vector<2x1x128xf32> to vector<2x128xf32>
      %cst_31 = arith.constant dense<0.000000e+00> : vector<2x128xf32>
      %116 = tpu.matmul %112, %20, %cst_31 {dimension_numbers = #tpu.dot_dimension_numbers<[1], [0], [0], [1], [0, 0, 1, 1], [], []>} : vector<2x32xf32>, vector<32x128xf32>, vector<2x128xf32> -> vector<2x128xf32>
      %117 = arith.addf %115, %116 : vector<2x128xf32>
      %118 = vector.extract_strided_slice %117 {offsets = [0, 0], sizes = [2, 32], strides = [1, 1]} : vector<2x128xf32> to vector<2x32xf32>
      %119 = arith.negf %118 : vector<2x32xf32>
      %120 = math.exp %119 : vector<2x32xf32>
      %cst_32 = arith.constant 1.000000e+00 : f32
      %121 = vector.broadcast %cst_32 : f32 to vector<2x32xf32>
      %122 = arith.addf %121, %120 : vector<2x32xf32>
      %123 = arith.divf %121, %122 : vector<2x32xf32>
      %124 = vector.extract_strided_slice %117 {offsets = [0, 32], sizes = [2, 32], strides = [1, 1]} : vector<2x128xf32> to vector<2x32xf32>
      %125 = arith.negf %124 : vector<2x32xf32>
      %126 = math.exp %125 : vector<2x32xf32>
      %cst_33 = arith.constant 1.000000e+00 : f32
      %127 = vector.broadcast %cst_33 : f32 to vector<2x32xf32>
      %128 = arith.addf %127, %126 : vector<2x32xf32>
      %129 = arith.divf %127, %128 : vector<2x32xf32>
      %130 = vector.extract_strided_slice %117 {offsets = [0, 64], sizes = [2, 32], strides = [1, 1]} : vector<2x128xf32> to vector<2x32xf32>
      %131 = math.tanh %130 : vector<2x32xf32>
      %132 = vector.extract_strided_slice %117 {offsets = [0, 96], sizes = [2, 32], strides = [1, 1]} : vector<2x128xf32> to vector<2x32xf32>
      %133 = arith.negf %132 : vector<2x32xf32>
      %134 = math.exp %133 : vector<2x32xf32>
      %cst_34 = arith.constant 1.000000e+00 : f32
      %135 = vector.broadcast %cst_34 : f32 to vector<2x32xf32>
      %136 = arith.addf %135, %134 : vector<2x32xf32>
      %137 = arith.divf %135, %136 : vector<2x32xf32>
      %138 = arith.mulf %129, %110 : vector<2x32xf32>
      %139 = arith.mulf %123, %131 : vector<2x32xf32>
      %140 = arith.addf %138, %139 : vector<2x32xf32>
      %141 = math.tanh %140 : vector<2x32xf32>
      %142 = arith.mulf %137, %141 : vector<2x32xf32>
      %143 = arith.addf %113, %142 : vector<2x32xf32>
      %144 = vector.extract_strided_slice %19 {offsets = [0, 4, 0], sizes = [2, 1, 128], strides = [1, 1, 1]} : vector<2x8x128xf32> to vector<2x1x128xf32>
      %145 = vector.shape_cast %144 : vector<2x1x128xf32> to vector<2x128xf32>
      %cst_35 = arith.constant dense<0.000000e+00> : vector<2x128xf32>
      %146 = tpu.matmul %142, %20, %cst_35 {dimension_numbers = #tpu.dot_dimension_numbers<[1], [0], [0], [1], [0, 0, 1, 1], [], []>} : vector<2x32xf32>, vector<32x128xf32>, vector<2x128xf32> -> vector<2x128xf32>
      %147 = arith.addf %145, %146 : vector<2x128xf32>
      %148 = vector.extract_strided_slice %147 {offsets = [0, 0], sizes = [2, 32], strides = [1, 1]} : vector<2x128xf32> to vector<2x32xf32>
      %149 = arith.negf %148 : vector<2x32xf32>
      %150 = math.exp %149 : vector<2x32xf32>
      %cst_36 = arith.constant 1.000000e+00 : f32
      %151 = vector.broadcast %cst_36 : f32 to vector<2x32xf32>
      %152 = arith.addf %151, %150 : vector<2x32xf32>
      %153 = arith.divf %151, %152 : vector<2x32xf32>
      %154 = vector.extract_strided_slice %147 {offsets = [0, 32], sizes = [2, 32], strides = [1, 1]} : vector<2x128xf32> to vector<2x32xf32>
      %155 = arith.negf %154 : vector<2x32xf32>
      %156 = math.exp %155 : vector<2x32xf32>
      %cst_37 = arith.constant 1.000000e+00 : f32
      %157 = vector.broadcast %cst_37 : f32 to vector<2x32xf32>
      %158 = arith.addf %157, %156 : vector<2x32xf32>
      %159 = arith.divf %157, %158 : vector<2x32xf32>
      %160 = vector.extract_strided_slice %147 {offsets = [0, 64], sizes = [2, 32], strides = [1, 1]} : vector<2x128xf32> to vector<2x32xf32>
      %161 = math.tanh %160 : vector<2x32xf32>
      %162 = vector.extract_strided_slice %147 {offsets = [0, 96], sizes = [2, 32], strides = [1, 1]} : vector<2x128xf32> to vector<2x32xf32>
      %163 = arith.negf %162 : vector<2x32xf32>
      %164 = math.exp %163 : vector<2x32xf32>
      %cst_38 = arith.constant 1.000000e+00 : f32
      %165 = vector.broadcast %cst_38 : f32 to vector<2x32xf32>
      %166 = arith.addf %165, %164 : vector<2x32xf32>
      %167 = arith.divf %165, %166 : vector<2x32xf32>
      %168 = arith.mulf %159, %140 : vector<2x32xf32>
      %169 = arith.mulf %153, %161 : vector<2x32xf32>
      %170 = arith.addf %168, %169 : vector<2x32xf32>
      %171 = math.tanh %170 : vector<2x32xf32>
      %172 = arith.mulf %167, %171 : vector<2x32xf32>
      %173 = arith.addf %143, %172 : vector<2x32xf32>
      %174 = vector.extract_strided_slice %19 {offsets = [0, 5, 0], sizes = [2, 1, 128], strides = [1, 1, 1]} : vector<2x8x128xf32> to vector<2x1x128xf32>
      %175 = vector.shape_cast %174 : vector<2x1x128xf32> to vector<2x128xf32>
      %cst_39 = arith.constant dense<0.000000e+00> : vector<2x128xf32>
      %176 = tpu.matmul %172, %20, %cst_39 {dimension_numbers = #tpu.dot_dimension_numbers<[1], [0], [0], [1], [0, 0, 1, 1], [], []>} : vector<2x32xf32>, vector<32x128xf32>, vector<2x128xf32> -> vector<2x128xf32>
      %177 = arith.addf %175, %176 : vector<2x128xf32>
      %178 = vector.extract_strided_slice %177 {offsets = [0, 0], sizes = [2, 32], strides = [1, 1]} : vector<2x128xf32> to vector<2x32xf32>
      %179 = arith.negf %178 : vector<2x32xf32>
      %180 = math.exp %179 : vector<2x32xf32>
      %cst_40 = arith.constant 1.000000e+00 : f32
      %181 = vector.broadcast %cst_40 : f32 to vector<2x32xf32>
      %182 = arith.addf %181, %180 : vector<2x32xf32>
      %183 = arith.divf %181, %182 : vector<2x32xf32>
      %184 = vector.extract_strided_slice %177 {offsets = [0, 32], sizes = [2, 32], strides = [1, 1]} : vector<2x128xf32> to vector<2x32xf32>
      %185 = arith.negf %184 : vector<2x32xf32>
      %186 = math.exp %185 : vector<2x32xf32>
      %cst_41 = arith.constant 1.000000e+00 : f32
      %187 = vector.broadcast %cst_41 : f32 to vector<2x32xf32>
      %188 = arith.addf %187, %186 : vector<2x32xf32>
      %189 = arith.divf %187, %188 : vector<2x32xf32>
      %190 = vector.extract_strided_slice %177 {offsets = [0, 64], sizes = [2, 32], strides = [1, 1]} : vector<2x128xf32> to vector<2x32xf32>
      %191 = math.tanh %190 : vector<2x32xf32>
      %192 = vector.extract_strided_slice %177 {offsets = [0, 96], sizes = [2, 32], strides = [1, 1]} : vector<2x128xf32> to vector<2x32xf32>
      %193 = arith.negf %192 : vector<2x32xf32>
      %194 = math.exp %193 : vector<2x32xf32>
      %cst_42 = arith.constant 1.000000e+00 : f32
      %195 = vector.broadcast %cst_42 : f32 to vector<2x32xf32>
      %196 = arith.addf %195, %194 : vector<2x32xf32>
      %197 = arith.divf %195, %196 : vector<2x32xf32>
      %198 = arith.mulf %189, %170 : vector<2x32xf32>
      %199 = arith.mulf %183, %191 : vector<2x32xf32>
      %200 = arith.addf %198, %199 : vector<2x32xf32>
      %201 = math.tanh %200 : vector<2x32xf32>
      %202 = arith.mulf %197, %201 : vector<2x32xf32>
      %203 = arith.addf %173, %202 : vector<2x32xf32>
      %204 = vector.extract_strided_slice %19 {offsets = [0, 6, 0], sizes = [2, 1, 128], strides = [1, 1, 1]} : vector<2x8x128xf32> to vector<2x1x128xf32>
      %205 = vector.shape_cast %204 : vector<2x1x128xf32> to vector<2x128xf32>
      %cst_43 = arith.constant dense<0.000000e+00> : vector<2x128xf32>
      %206 = tpu.matmul %202, %20, %cst_43 {dimension_numbers = #tpu.dot_dimension_numbers<[1], [0], [0], [1], [0, 0, 1, 1], [], []>} : vector<2x32xf32>, vector<32x128xf32>, vector<2x128xf32> -> vector<2x128xf32>
      %207 = arith.addf %205, %206 : vector<2x128xf32>
      %208 = vector.extract_strided_slice %207 {offsets = [0, 0], sizes = [2, 32], strides = [1, 1]} : vector<2x128xf32> to vector<2x32xf32>
      %209 = arith.negf %208 : vector<2x32xf32>
      %210 = math.exp %209 : vector<2x32xf32>
      %cst_44 = arith.constant 1.000000e+00 : f32
      %211 = vector.broadcast %cst_44 : f32 to vector<2x32xf32>
      %212 = arith.addf %211, %210 : vector<2x32xf32>
      %213 = arith.divf %211, %212 : vector<2x32xf32>
      %214 = vector.extract_strided_slice %207 {offsets = [0, 32], sizes = [2, 32], strides = [1, 1]} : vector<2x128xf32> to vector<2x32xf32>
      %215 = arith.negf %214 : vector<2x32xf32>
      %216 = math.exp %215 : vector<2x32xf32>
      %cst_45 = arith.constant 1.000000e+00 : f32
      %217 = vector.broadcast %cst_45 : f32 to vector<2x32xf32>
      %218 = arith.addf %217, %216 : vector<2x32xf32>
      %219 = arith.divf %217, %218 : vector<2x32xf32>
      %220 = vector.extract_strided_slice %207 {offsets = [0, 64], sizes = [2, 32], strides = [1, 1]} : vector<2x128xf32> to vector<2x32xf32>
      %221 = math.tanh %220 : vector<2x32xf32>
      %222 = vector.extract_strided_slice %207 {offsets = [0, 96], sizes = [2, 32], strides = [1, 1]} : vector<2x128xf32> to vector<2x32xf32>
      %223 = arith.negf %222 : vector<2x32xf32>
      %224 = math.exp %223 : vector<2x32xf32>
      %cst_46 = arith.constant 1.000000e+00 : f32
      %225 = vector.broadcast %cst_46 : f32 to vector<2x32xf32>
      %226 = arith.addf %225, %224 : vector<2x32xf32>
      %227 = arith.divf %225, %226 : vector<2x32xf32>
      %228 = arith.mulf %219, %200 : vector<2x32xf32>
      %229 = arith.mulf %213, %221 : vector<2x32xf32>
      %230 = arith.addf %228, %229 : vector<2x32xf32>
      %231 = math.tanh %230 : vector<2x32xf32>
      %232 = arith.mulf %227, %231 : vector<2x32xf32>
      %233 = arith.addf %203, %232 : vector<2x32xf32>
      %234 = vector.extract_strided_slice %19 {offsets = [0, 7, 0], sizes = [2, 1, 128], strides = [1, 1, 1]} : vector<2x8x128xf32> to vector<2x1x128xf32>
      %235 = vector.shape_cast %234 : vector<2x1x128xf32> to vector<2x128xf32>
      %cst_47 = arith.constant dense<0.000000e+00> : vector<2x128xf32>
      %236 = tpu.matmul %232, %20, %cst_47 {dimension_numbers = #tpu.dot_dimension_numbers<[1], [0], [0], [1], [0, 0, 1, 1], [], []>} : vector<2x32xf32>, vector<32x128xf32>, vector<2x128xf32> -> vector<2x128xf32>
      %237 = arith.addf %235, %236 : vector<2x128xf32>
      %238 = vector.extract_strided_slice %237 {offsets = [0, 0], sizes = [2, 32], strides = [1, 1]} : vector<2x128xf32> to vector<2x32xf32>
      %239 = arith.negf %238 : vector<2x32xf32>
      %240 = math.exp %239 : vector<2x32xf32>
      %cst_48 = arith.constant 1.000000e+00 : f32
      %241 = vector.broadcast %cst_48 : f32 to vector<2x32xf32>
      %242 = arith.addf %241, %240 : vector<2x32xf32>
      %243 = arith.divf %241, %242 : vector<2x32xf32>
      %244 = vector.extract_strided_slice %237 {offsets = [0, 32], sizes = [2, 32], strides = [1, 1]} : vector<2x128xf32> to vector<2x32xf32>
      %245 = arith.negf %244 : vector<2x32xf32>
      %246 = math.exp %245 : vector<2x32xf32>
      %cst_49 = arith.constant 1.000000e+00 : f32
      %247 = vector.broadcast %cst_49 : f32 to vector<2x32xf32>
      %248 = arith.addf %247, %246 : vector<2x32xf32>
      %249 = arith.divf %247, %248 : vector<2x32xf32>
      %250 = vector.extract_strided_slice %237 {offsets = [0, 64], sizes = [2, 32], strides = [1, 1]} : vector<2x128xf32> to vector<2x32xf32>
      %251 = math.tanh %250 : vector<2x32xf32>
      %252 = vector.extract_strided_slice %237 {offsets = [0, 96], sizes = [2, 32], strides = [1, 1]} : vector<2x128xf32> to vector<2x32xf32>
      %253 = arith.negf %252 : vector<2x32xf32>
      %254 = math.exp %253 : vector<2x32xf32>
      %cst_50 = arith.constant 1.000000e+00 : f32
      %255 = vector.broadcast %cst_50 : f32 to vector<2x32xf32>
      %256 = arith.addf %255, %254 : vector<2x32xf32>
      %257 = arith.divf %255, %256 : vector<2x32xf32>
      %258 = arith.mulf %249, %230 : vector<2x32xf32>
      %259 = arith.mulf %243, %251 : vector<2x32xf32>
      %260 = arith.addf %258, %259 : vector<2x32xf32>
      %261 = math.tanh %260 : vector<2x32xf32>
      %262 = arith.mulf %257, %261 : vector<2x32xf32>
      %263 = arith.addf %233, %262 : vector<2x32xf32>
      %cst_51 = arith.constant 1.250000e-01 : f32
      %264 = vector.broadcast %cst_51 : f32 to vector<2x32xf32>
      %265 = arith.mulf %263, %264 : vector<2x32xf32>
      %cst_52 = arith.constant dense<0.000000e+00> : vector<2xf32>
      %266 = vector.multi_reduction <add>, %265, %cst_52 [1] : vector<2x32xf32> to vector<2xf32>
      %267 = vector.shape_cast %266 : vector<2xf32> to vector<2x1xf32>
      %cst_53 = arith.constant 3.200000e+01 : f32
      %268 = vector.broadcast %cst_53 : f32 to vector<2x1xf32>
      %269 = arith.divf %267, %268 : vector<2x1xf32>
      %270 = vector.broadcast %269 : vector<2x1xf32> to vector<2x32xf32>
      %271 = arith.subf %265, %270 : vector<2x32xf32>
      %272 = arith.mulf %271, %271 : vector<2x32xf32>
      %cst_54 = arith.constant dense<0.000000e+00> : vector<2xf32>
      %273 = vector.multi_reduction <add>, %272, %cst_54 [1] : vector<2x32xf32> to vector<2xf32>
      %274 = vector.shape_cast %273 : vector<2xf32> to vector<2x1xf32>
      %cst_55 = arith.constant 3.200000e+01 : f32
      %275 = vector.broadcast %cst_55 : f32 to vector<2x1xf32>
      %276 = arith.divf %274, %275 : vector<2x1xf32>
      %277 = vector.broadcast %269 : vector<2x1xf32> to vector<2x32xf32>
      %278 = arith.subf %265, %277 : vector<2x32xf32>
      %cst_56 = arith.constant 9.99999974E-6 : f32
      %279 = vector.broadcast %cst_56 : f32 to vector<2x1xf32>
      %280 = arith.addf %276, %279 : vector<2x1xf32>
      %281 = math.rsqrt %280 : vector<2x1xf32>
      %282 = vector.broadcast %281 : vector<2x1xf32> to vector<2x32xf32>
      %283 = arith.mulf %278, %282 : vector<2x32xf32>
      %c0_57 = arith.constant 0 : index
      %c0_58 = arith.constant 0 : index
      %284 = vector.load %arg7[%c0_57, %c0_58] : memref<1x32xf32, #tpu.memory_space<vmem>>, vector<1x32xf32>
      %285 = vector.broadcast %284 : vector<1x32xf32> to vector<2x32xf32>
      %286 = arith.mulf %283, %285 : vector<2x32xf32>
      %c0_59 = arith.constant 0 : index
      %c0_60 = arith.constant 0 : index
      %287 = vector.load %arg8[%c0_59, %c0_60] : memref<1x32xf32, #tpu.memory_space<vmem>>, vector<1x32xf32>
      %288 = vector.broadcast %287 : vector<1x32xf32> to vector<2x32xf32>
      %289 = arith.addf %286, %288 : vector<2x32xf32>
      %cst_61 = arith.constant 0.000000e+00 : f32
      %290 = vector.broadcast %cst_61 : f32 to vector<2x32xf32>
      %291 = arith.cmpf oge, %289, %290 : vector<2x32xf32>
      %cst_62 = arith.constant 0.00999999977 : f32
      %292 = vector.broadcast %cst_62 : f32 to vector<2x32xf32>
      %293 = arith.mulf %292, %289 : vector<2x32xf32>
      %294 = arith.select %291, %289, %293 : vector<2x32xi1>, vector<2x32xf32>
      %c0_63 = arith.constant 0 : index
      %c0_64 = arith.constant 0 : index
      %295 = vector.load %arg9[%c0_63, %c0_64] : memref<32x2xf32, #tpu.memory_space<vmem>>, vector<32x2xf32>
      %cst_65 = arith.constant dense<0.000000e+00> : vector<2x2xf32>
      %296 = tpu.matmul %294, %295, %cst_65 {dimension_numbers = #tpu.dot_dimension_numbers<[1], [0], [0], [1], [0, 0, 1, 1], [], []>} : vector<2x32xf32>, vector<32x2xf32>, vector<2x2xf32> -> vector<2x2xf32>
      %c0_66 = arith.constant 0 : index
      %c0_67 = arith.constant 0 : index
      %297 = vector.load %arg10[%c0_66, %c0_67] : memref<1x2xf32, #tpu.memory_space<vmem>>, vector<1x2xf32>
      %298 = vector.broadcast %297 : vector<1x2xf32> to vector<2x2xf32>
      %299 = arith.addf %296, %298 : vector<2x2xf32>
      %c0_68 = arith.constant 0 : index
      %c0_69 = arith.constant 0 : index
      %300 = vector.load %arg11[%c0_68, %c0_69] : memref<2x2xf32, #tpu.memory_space<vmem>>, vector<2x2xf32>
      tpu.vector_store %arg11[%c0_68, %c0_69], %299 {strides = array<i32>} : memref<2x2xf32, #tpu.memory_space<vmem>>, vector<2x2xf32>,
    } else {
    }
    return
  }
  func.func @transform_0(%arg0: i32) -> (i32, i32) {
    %c0_i32 = arith.constant 0 : i32
    %c0_i32_0 = arith.constant 0 : i32
    return %arg0, %c0_i32 : i32, i32
  }
  func.func @transform_1(%arg0: i32) -> (i32, i32) {
    %c0_i32 = arith.constant 0 : i32
    %c0_i32_0 = arith.constant 0 : i32
    %c0_i32_1 = arith.constant 0 : i32
    return %c0_i32, %c0_i32_0 : i32, i32
  }
  func.func @transform_2(%arg0: i32) -> (i32, i32) {
    %c0_i32 = arith.constant 0 : i32
    %c0_i32_0 = arith.constant 0 : i32
    %c0_i32_1 = arith.constant 0 : i32
    return %c0_i32, %c0_i32_0 : i32, i32
  }
  func.func @transform_3(%arg0: i32) -> (i32, i32) {
    %c0_i32 = arith.constant 0 : i32
    %c0_i32_0 = arith.constant 0 : i32
    %c0_i32_1 = arith.constant 0 : i32
    return %c0_i32, %c0_i32_0 : i32, i32
  }
  func.func @transform_4(%arg0: i32) -> (i32, i32) {
    %c0_i32 = arith.constant 0 : i32
    %c0_i32_0 = arith.constant 0 : i32
    %c0_i32_1 = arith.constant 0 : i32
    return %c0_i32, %c0_i32_0 : i32, i32
  }
  func.func @transform_5(%arg0: i32) -> (i32, i32) {
    %c0_i32 = arith.constant 0 : i32
    %c0_i32_0 = arith.constant 0 : i32
    %c0_i32_1 = arith.constant 0 : i32
    return %c0_i32, %c0_i32_0 : i32, i32
  }
  func.func @transform_6(%arg0: i32) -> (i32, i32) {
    %c0_i32 = arith.constant 0 : i32
    %c0_i32_0 = arith.constant 0 : i32
    %c0_i32_1 = arith.constant 0 : i32
    return %c0_i32, %c0_i32_0 : i32, i32
  }
  func.func @transform_7(%arg0: i32) -> (i32, i32) {
    %c0_i32 = arith.constant 0 : i32
    %c0_i32_0 = arith.constant 0 : i32
    %c0_i32_1 = arith.constant 0 : i32
    return %c0_i32, %c0_i32_0 : i32, i32
  }
  func.func @transform_8(%arg0: i32) -> (i32, i32) {
    %c0_i32 = arith.constant 0 : i32
    %c0_i32_0 = arith.constant 0 : i32
    %c0_i32_1 = arith.constant 0 : i32
    return %c0_i32, %c0_i32_0 : i32, i32
  }
  func.func @transform_9(%arg0: i32) -> (i32, i32) {
    %c0_i32 = arith.constant 0 : i32
    %c0_i32_0 = arith.constant 0 : i32
    %c0_i32_1 = arith.constant 0 : i32
    return %c0_i32, %c0_i32_0 : i32, i32
  }
  func.func @transform_10(%arg0: i32) -> (i32, i32) {
    %c0_i32 = arith.constant 0 : i32
    %c0_i32_0 = arith.constant 0 : i32
    %c0_i32_1 = arith.constant 0 : i32
    return %c0_i32, %c0_i32_0 : i32, i32
  }
}

</mosaic_0001>

<llo_original>
// kernel: face_classifier_lstm.1
$region0: #{face_classifier_lstm.1}
  #allocation0 [shape = 'u32[]', space=smem, size = 0x4, offset = 0x4, fixed_abs, tag = 'smem constant byte address 0x4 - core index']
  #allocation1 [shape = 'u32[144,128]{1,0:T(1,128)}', space=vmem, size = 0x12000, scoped, tag = 'internal scratch']
  #allocation2 [shape = 'f32[16,128]{1,0:T(8,128)}', space=vmem, size = 0x2000, scoped, tag = 'scratch operand']
  %s0 = inlined_call_operand.vmem [shape: bf16[16,1024], index: 0, kind: input, shape index: {}]
  %s1 = inlined_call_operand.vmem [shape: bf16[1024,128], index: 1, kind: input, shape index: {}]
  %s2 = inlined_call_operand.vmem [shape: f32[1,128], index: 2, kind: input, shape index: {}]
  %s3 = inlined_call_operand.vmem [shape: f32[128,128], index: 3, kind: input, shape index: {}]
  %s4 = inlined_call_operand.vmem [shape: f32[32,128], index: 4, kind: input, shape index: {}]
  %s5 = inlined_call_operand.vmem [shape: f32[1,128], index: 5, kind: input, shape index: {}]
  %s6 = inlined_call_operand.vmem [shape: f32[1,32], index: 6, kind: input, shape index: {}]
  %s7 = inlined_call_operand.vmem [shape: f32[1,32], index: 7, kind: input, shape index: {}]
  %s8 = inlined_call_operand.vmem [shape: f32[32,2], index: 8, kind: input, shape index: {}]
  %s9 = inlined_call_operand.vmem [shape: f32[1,2], index: 9, kind: input, shape index: {}]
  %s10 = inlined_call_operand.hbm [shape: f32[2,2], index: 10, kind: output, shape index: {}]
  %s11 = sld [smem:[#allocation0]]
  $region54: #{face_classifier_lstm.1} parent=0
    _
  %s13 = ssub.s32 1, %s11
  %s14 = scalar_select 0, %s13, %s11
  $region1: #{face_classifier_lstm.1} parent=0
    #allocation3 [shape = 'u8[1024]{0}', space=vmem, size = 0x400, scoped, tag = 'output window, operand 0, single buffered']
    #allocation4 [shape = 's32[1]{0}', space=sflag, size = 0x4, scoped, tag = 'scoped memory for face_classifier_lstm.1']
    %15 = vsyncpa [#allocation4], 0
    // Predicated region
    $region2: #{face_classifier_lstm.1} parent=1 // pred_check
      _
    $region3: #{face_classifier_lstm.1} parent=1 // pred_check_branch
      %17 = sbr.rel (0) target = $region5
    $region4: #{face_classifier_lstm.1} parent=1 // pred_region
      _
    $region5: #{face_classifier_lstm.1} parent=1 // pred_fallthru
      _
    // Predicated region
    $region6: #{face_classifier_lstm.1} parent=1 // pred_check
      _
    $region7: #{face_classifier_lstm.1} parent=1 // pred_check_branch
      %19 = sbr.rel (0) target = $region9
    $region8: #{face_classifier_lstm.1} parent=1 // pred_region
      _
    $region9: #{face_classifier_lstm.1} parent=1 // pred_fallthru
      _
    // Predicated region
    $region10: #{face_classifier_lstm.1} parent=1 // pred_check
      _
    $region11: #{face_classifier_lstm.1} parent=1 // pred_check_branch
      %21 = sbr.rel (0) target = $region13
    $region12: #{face_classifier_lstm.1} parent=1 // pred_region
      _
    $region13: #{face_classifier_lstm.1} parent=1 // pred_fallthru
      _
    // Predicated region
    $region14: #{face_classifier_lstm.1} parent=1 // pred_check
      _
    $region15: #{face_classifier_lstm.1} parent=1 // pred_check_branch
      %23 = sbr.rel (0) target = $region17
    $region16: #{face_classifier_lstm.1} parent=1 // pred_region
      _
    $region17: #{face_classifier_lstm.1} parent=1 // pred_fallthru
      _
    // Predicated region
    $region18: #{face_classifier_lstm.1} parent=1 // pred_check
      _
    $region19: #{face_classifier_lstm.1} parent=1 // pred_check_branch
      %25 = sbr.rel (0) target = $region21
    $region20: #{face_classifier_lstm.1} parent=1 // pred_region
      _
    $region21: #{face_classifier_lstm.1} parent=1 // pred_fallthru
      _
    // Predicated region
    $region22: #{face_classifier_lstm.1} parent=1 // pred_check
      _
    $region23: #{face_classifier_lstm.1} parent=1 // pred_check_branch
      %27 = sbr.rel (0) target = $region25
    $region24: #{face_classifier_lstm.1} parent=1 // pred_region
      _
    $region25: #{face_classifier_lstm.1} parent=1 // pred_fallthru
      _
    // Predicated region
    $region26: #{face_classifier_lstm.1} parent=1 // pred_check
      _
    $region27: #{face_classifier_lstm.1} parent=1 // pred_check_branch
      %29 = sbr.rel (0) target = $region29
    $region28: #{face_classifier_lstm.1} parent=1 // pred_region
      _
    $region29: #{face_classifier_lstm.1} parent=1 // pred_fallthru
      _
    // Predicated region
    $region30: #{face_classifier_lstm.1} parent=1 // pred_check
      _
    $region31: #{face_classifier_lstm.1} parent=1 // pred_check_branch
      %31 = sbr.rel (0) target = $region33
    $region32: #{face_classifier_lstm.1} parent=1 // pred_region
      _
    $region33: #{face_classifier_lstm.1} parent=1 // pred_fallthru
      _
    // Predicated region
    $region34: #{face_classifier_lstm.1} parent=1 // pred_check
      _
    $region35: #{face_classifier_lstm.1} parent=1 // pred_check_branch
      %33 = sbr.rel (0) target = $region37
    $region36: #{face_classifier_lstm.1} parent=1 // pred_region
      _
    $region37: #{face_classifier_lstm.1} parent=1 // pred_fallthru
      _
    // Predicated region
    $region38: #{face_classifier_lstm.1} parent=1 // pred_check
      _
    $region39: #{face_classifier_lstm.1} parent=1 // pred_check_branch
      %35 = sbr.rel (0) target = $region41
    $region40: #{face_classifier_lstm.1} parent=1 // pred_region
      _
    $region41: #{face_classifier_lstm.1} parent=1 // pred_fallthru
      _
    %v37 = vld [vmem:[%s0] sm:$0xff]
    %v38 = vld [vmem:[%s0 + $0x8] sm:$0xff]
    %v39 = vld [vmem:[%s0 + $0x10] sm:$0xff]
    %v40 = vld [vmem:[%s0 + $0x18] sm:$0xff]
    %v41 = vld [vmem:[%s0 + $0x20] sm:$0xff]
    %v42 = vld [vmem:[%s0 + $0x28] sm:$0xff]
    %v43 = vld [vmem:[%s0 + $0x30] sm:$0xff]
    %v44 = vld [vmem:[%s0 + $0x38] sm:$0xff]
    %v45 = vld [vmem:[%s1] sm:$0xf]
    %v46 = vld [vmem:[%s1 + $0x4] sm:$0xf]
    %v47 = vld [vmem:[%s1 + $0x8] sm:$0xf]
    %v48 = vld [vmem:[%s1 + $0xc] sm:$0xf]
    %v49 = vld [vmem:[%s1 + $0x10] sm:$0xf]
    %v50 = vld [vmem:[%s1 + $0x14] sm:$0xf]
    %v51 = vld [vmem:[%s1 + $0x18] sm:$0xf]
    %v52 = vld [vmem:[%s1 + $0x1c] sm:$0xf]
    %v53 = vld [vmem:[%s1 + $0x20] sm:$0xf]
    %v54 = vld [vmem:[%s1 + $0x24] sm:$0xf]
    %v55 = vld [vmem:[%s1 + $0x28] sm:$0xf]
    %v56 = vld [vmem:[%s1 + $0x2c] sm:$0xf]
    %v57 = vld [vmem:[%s1 + $0x30] sm:$0xf]
    %v58 = vld [vmem:[%s1 + $0x34] sm:$0xf]
    %v59 = vld [vmem:[%s1 + $0x38] sm:$0xf]
    %v60 = vld [vmem:[%s1 + $0x3c] sm:$0xf]
    %v61 = vld [vmem:[%s1 + $0x40] sm:$0xf]
    %v62 = vld [vmem:[%s1 + $0x44] sm:$0xf]
    %v63 = vld [vmem:[%s1 + $0x48] sm:$0xf]
    %v64 = vld [vmem:[%s1 + $0x4c] sm:$0xf]
    %v65 = vld [vmem:[%s1 + $0x50] sm:$0xf]
    %v66 = vld [vmem:[%s1 + $0x54] sm:$0xf]
    %v67 = vld [vmem:[%s1 + $0x58] sm:$0xf]
    %v68 = vld [vmem:[%s1 + $0x5c] sm:$0xf]
    %v69 = vld [vmem:[%s1 + $0x60] sm:$0xf]
    %v70 = vld [vmem:[%s1 + $0x64] sm:$0xf]
    %v71 = vld [vmem:[%s1 + $0x68] sm:$0xf]
    %v72 = vld [vmem:[%s1 + $0x6c] sm:$0xf]
    %v73 = vld [vmem:[%s1 + $0x70] sm:$0xf]
    %v74 = vld [vmem:[%s1 + $0x74] sm:$0xf]
    %v75 = vld [vmem:[%s1 + $0x78] sm:$0xf]
    %v76 = vld [vmem:[%s1 + $0x7c] sm:$0xf]
    %v77 = vld [vmem:[%s1 + $0x80] sm:$0xf]
    %v78 = vld [vmem:[%s1 + $0x84] sm:$0xf]
    %v79 = vld [vmem:[%s1 + $0x88] sm:$0xf]
    %v80 = vld [vmem:[%s1 + $0x8c] sm:$0xf]
    %v81 = vld [vmem:[%s1 + $0x90] sm:$0xf]
    %v82 = vld [vmem:[%s1 + $0x94] sm:$0xf]
    %v83 = vld [vmem:[%s1 + $0x98] sm:$0xf]
    %v84 = vld [vmem:[%s1 + $0x9c] sm:$0xf]
    %v85 = vld [vmem:[%s1 + $0xa0] sm:$0xf]
    %v86 = vld [vmem:[%s1 + $0xa4] sm:$0xf]
    %v87 = vld [vmem:[%s1 + $0xa8] sm:$0xf]
    %v88 = vld [vmem:[%s1 + $0xac] sm:$0xf]
    %v89 = vld [vmem:[%s1 + $0xb0] sm:$0xf]
    %v90 = vld [vmem:[%s1 + $0xb4] sm:$0xf]
    %v91 = vld [vmem:[%s1 + $0xb8] sm:$0xf]
    %v92 = vld [vmem:[%s1 + $0xbc] sm:$0xf]
    %v93 = vld [vmem:[%s1 + $0xc0] sm:$0xf]
    %v94 = vld [vmem:[%s1 + $0xc4] sm:$0xf]
    %v95 = vld [vmem:[%s1 + $0xc8] sm:$0xf]
    %v96 = vld [vmem:[%s1 + $0xcc] sm:$0xf]
    %v97 = vld [vmem:[%s1 + $0xd0] sm:$0xf]
    %v98 = vld [vmem:[%s1 + $0xd4] sm:$0xf]
    %v99 = vld [vmem:[%s1 + $0xd8] sm:$0xf]
    %v100 = vld [vmem:[%s1 + $0xdc] sm:$0xf]
    %v101 = vld [vmem:[%s1 + $0xe0] sm:$0xf]
    %v102 = vld [vmem:[%s1 + $0xe4] sm:$0xf]
    %v103 = vld [vmem:[%s1 + $0xe8] sm:$0xf]
    %v104 = vld [vmem:[%s1 + $0xec] sm:$0xf]
    %v105 = vld [vmem:[%s1 + $0xf0] sm:$0xf]
    %v106 = vld [vmem:[%s1 + $0xf4] sm:$0xf]
    %v107 = vld [vmem:[%s1 + $0xf8] sm:$0xf]
    %v108 = vld [vmem:[%s1 + $0xfc] sm:$0xf]
    %v109 = vld [vmem:[%s1 + $0x100] sm:$0xf]
    %v110 = vld [vmem:[%s1 + $0x104] sm:$0xf]
    %v111 = vld [vmem:[%s1 + $0x108] sm:$0xf]
    %v112 = vld [vmem:[%s1 + $0x10c] sm:$0xf]
    %v113 = vld [vmem:[%s1 + $0x110] sm:$0xf]
    %v114 = vld [vmem:[%s1 + $0x114] sm:$0xf]
    %v115 = vld [vmem:[%s1 + $0x118] sm:$0xf]
    %v116 = vld [vmem:[%s1 + $0x11c] sm:$0xf]
    %v117 = vld [vmem:[%s1 + $0x120] sm:$0xf]
    %v118 = vld [vmem:[%s1 + $0x124] sm:$0xf]
    %v119 = vld [vmem:[%s1 + $0x128] sm:$0xf]
    %v120 = vld [vmem:[%s1 + $0x12c] sm:$0xf]
    %v121 = vld [vmem:[%s1 + $0x130] sm:$0xf]
    %v122 = vld [vmem:[%s1 + $0x134] sm:$0xf]
    %v123 = vld [vmem:[%s1 + $0x138] sm:$0xf]
    %v124 = vld [vmem:[%s1 + $0x13c] sm:$0xf]
    %v125 = vld [vmem:[%s1 + $0x140] sm:$0xf]
    %v126 = vld [vmem:[%s1 + $0x144] sm:$0xf]
    %v127 = vld [vmem:[%s1 + $0x148] sm:$0xf]
    %v128 = vld [vmem:[%s1 + $0x14c] sm:$0xf]
    %v129 = vld [vmem:[%s1 + $0x150] sm:$0xf]
    %v130 = vld [vmem:[%s1 + $0x154] sm:$0xf]
    %v131 = vld [vmem:[%s1 + $0x158] sm:$0xf]
    %v132 = vld [vmem:[%s1 + $0x15c] sm:$0xf]
    %v133 = vld [vmem:[%s1 + $0x160] sm:$0xf]
    %v134 = vld [vmem:[%s1 + $0x164] sm:$0xf]
    %v135 = vld [vmem:[%s1 + $0x168] sm:$0xf]
    %v136 = vld [vmem:[%s1 + $0x16c] sm:$0xf]
    %v137 = vld [vmem:[%s1 + $0x170] sm:$0xf]
    %v138 = vld [vmem:[%s1 + $0x174] sm:$0xf]
    %v139 = vld [vmem:[%s1 + $0x178] sm:$0xf]
    %v140 = vld [vmem:[%s1 + $0x17c] sm:$0xf]
    %v141 = vld [vmem:[%s1 + $0x180] sm:$0xf]
    %v142 = vld [vmem:[%s1 + $0x184] sm:$0xf]
    %v143 = vld [vmem:[%s1 + $0x188] sm:$0xf]
    %v144 = vld [vmem:[%s1 + $0x18c] sm:$0xf]
    %v145 = vld [vmem:[%s1 + $0x190] sm:$0xf]
    %v146 = vld [vmem:[%s1 + $0x194] sm:$0xf]
    %v147 = vld [vmem:[%s1 + $0x198] sm:$0xf]
    %v148 = vld [vmem:[%s1 + $0x19c] sm:$0xf]
    %v149 = vld [vmem:[%s1 + $0x1a0] sm:$0xf]
    %v150 = vld [vmem:[%s1 + $0x1a4] sm:$0xf]
    %v151 = vld [vmem:[%s1 + $0x1a8] sm:$0xf]
    %v152 = vld [vmem:[%s1 + $0x1ac] sm:$0xf]
    %v153 = vld [vmem:[%s1 + $0x1b0] sm:$0xf]
    %v154 = vld [vmem:[%s1 + $0x1b4] sm:$0xf]
    %v155 = vld [vmem:[%s1 + $0x1b8] sm:$0xf]
    %v156 = vld [vmem:[%s1 + $0x1bc] sm:$0xf]
    %v157 = vld [vmem:[%s1 + $0x1c0] sm:$0xf]
    %v158 = vld [vmem:[%s1 + $0x1c4] sm:$0xf]
    %v159 = vld [vmem:[%s1 + $0x1c8] sm:$0xf]
    %v160 = vld [vmem:[%s1 + $0x1cc] sm:$0xf]
    %v161 = vld [vmem:[%s1 + $0x1d0] sm:$0xf]
    %v162 = vld [vmem:[%s1 + $0x1d4] sm:$0xf]
    %v163 = vld [vmem:[%s1 + $0x1d8] sm:$0xf]
    %v164 = vld [vmem:[%s1 + $0x1dc] sm:$0xf]
    %v165 = vld [vmem:[%s1 + $0x1e0] sm:$0xf]
    %v166 = vld [vmem:[%s1 + $0x1e4] sm:$0xf]
    %v167 = vld [vmem:[%s1 + $0x1e8] sm:$0xf]
    %v168 = vld [vmem:[%s1 + $0x1ec] sm:$0xf]
    %v169 = vld [vmem:[%s1 + $0x1f0] sm:$0xf]
    %v170 = vld [vmem:[%s1 + $0x1f4] sm:$0xf]
    %v171 = vld [vmem:[%s1 + $0x1f8] sm:$0xf]
    %v172 = vld [vmem:[%s1 + $0x1fc] sm:$0xf]
    %v173 = vld [vmem:[%s2] sm:$0x1]
    %v175 = vlaneseq
    %v176 = vshrl.u32 %v175, 7
    %v177 = vsub.s32 0, %v176
    %v178 = vrot.slane %v173, %v177
    %v188 = vunpack.c.l.b16 %v37
    %v189 = vunpack.c.h.b16 %v37
    %v190 = vunpack.c.l.b16 %v38
    %v191 = vunpack.c.h.b16 %v38
    %v192 = vunpack.c.l.b16 %v39
    %v193 = vunpack.c.h.b16 %v39
    %v194 = vunpack.c.l.b16 %v40
    %v195 = vunpack.c.h.b16 %v40
    %v196 = vunpack.c.l.b16 %v41
    %v197 = vunpack.c.h.b16 %v41
    %v198 = vunpack.c.l.b16 %v42
    %v199 = vunpack.c.h.b16 %v42
    %v200 = vunpack.c.l.b16 %v43
    %v201 = vunpack.c.h.b16 %v43
    %v202 = vunpack.c.l.b16 %v44
    %v203 = vunpack.c.h.b16 %v44
    %v204 = vpack.c.b16 %v196, %v188
    %v205 = vpack.c.b16 %v197, %v189
    %v206 = vpack.c.b16 %v198, %v190
    %v207 = vpack.c.b16 %v199, %v191
    %v208 = vpack.c.b16 %v200, %v192
    %v209 = vpack.c.b16 %v201, %v193
    %v210 = vpack.c.b16 %v202, %v194
    %v211 = vpack.c.b16 %v203, %v195
    %v348 = vunpack.c.l.b16 %v45
    %v349 = vunpack.c.l.b16 %v46
    %v350 = vunpack.c.l.b16 %v47
    %v351 = vunpack.c.l.b16 %v48
    %v352 = vunpack.c.l.b16 %v49
    %v353 = vunpack.c.l.b16 %v50
    %v354 = vunpack.c.l.b16 %v51
    %v355 = vunpack.c.l.b16 %v52
    %v356 = vunpack.c.l.b16 %v53
    %v357 = vunpack.c.l.b16 %v54
    %v358 = vunpack.c.l.b16 %v55
    %v359 = vunpack.c.l.b16 %v56
    %v360 = vunpack.c.l.b16 %v57
    %v361 = vunpack.c.l.b16 %v58
    %v362 = vunpack.c.l.b16 %v59
    %v363 = vunpack.c.l.b16 %v60
    %v364 = vunpack.c.l.b16 %v61
    %v365 = vunpack.c.l.b16 %v62
    %v366 = vunpack.c.l.b16 %v63
    %v367 = vunpack.c.l.b16 %v64
    %v368 = vunpack.c.l.b16 %v65
    %v369 = vunpack.c.l.b16 %v66
    %v370 = vunpack.c.l.b16 %v67
    %v371 = vunpack.c.l.b16 %v68
    %v372 = vunpack.c.l.b16 %v69
    %v373 = vunpack.c.l.b16 %v70
    %v374 = vunpack.c.l.b16 %v71
    %v375 = vunpack.c.l.b16 %v72
    %v376 = vunpack.c.l.b16 %v73
    %v377 = vunpack.c.l.b16 %v74
    %v378 = vunpack.c.l.b16 %v75
    %v379 = vunpack.c.l.b16 %v76
    %v380 = vunpack.c.l.b16 %v77
    %v381 = vunpack.c.l.b16 %v78
    %v382 = vunpack.c.l.b16 %v79
    %v383 = vunpack.c.l.b16 %v80
    %v384 = vunpack.c.l.b16 %v81
    %v385 = vunpack.c.l.b16 %v82
    %v386 = vunpack.c.l.b16 %v83
    %v387 = vunpack.c.l.b16 %v84
    %v388 = vunpack.c.l.b16 %v85
    %v389 = vunpack.c.l.b16 %v86
    %v390 = vunpack.c.l.b16 %v87
    %v391 = vunpack.c.l.b16 %v88
    %v392 = vunpack.c.l.b16 %v89
    %v393 = vunpack.c.l.b16 %v90
    %v394 = vunpack.c.l.b16 %v91
    %v395 = vunpack.c.l.b16 %v92
    %v396 = vunpack.c.l.b16 %v93
    %v397 = vunpack.c.l.b16 %v94
    %v398 = vunpack.c.l.b16 %v95
    %v399 = vunpack.c.l.b16 %v96
    %v400 = vunpack.c.l.b16 %v97
    %v401 = vunpack.c.l.b16 %v98
    %v402 = vunpack.c.l.b16 %v99
    %v403 = vunpack.c.l.b16 %v100
    %v404 = vunpack.c.l.b16 %v101
    %v405 = vunpack.c.l.b16 %v102
    %v406 = vunpack.c.l.b16 %v103
    %v407 = vunpack.c.l.b16 %v104
    %v408 = vunpack.c.l.b16 %v105
    %v409 = vunpack.c.l.b16 %v106
    %v410 = vunpack.c.l.b16 %v107
    %v411 = vunpack.c.l.b16 %v108
    %v412 = vunpack.c.l.b16 %v109
    %v413 = vunpack.c.l.b16 %v110
    %v414 = vunpack.c.l.b16 %v111
    %v415 = vunpack.c.l.b16 %v112
    %v416 = vunpack.c.l.b16 %v113
    %v417 = vunpack.c.l.b16 %v114
    %v418 = vunpack.c.l.b16 %v115
    %v419 = vunpack.c.l.b16 %v116
    %v420 = vunpack.c.l.b16 %v117
    %v421 = vunpack.c.l.b16 %v118
    %v422 = vunpack.c.l.b16 %v119
    %v423 = vunpack.c.l.b16 %v120
    %v424 = vunpack.c.l.b16 %v121
    %v425 = vunpack.c.l.b16 %v122
    %v426 = vunpack.c.l.b16 %v123
    %v427 = vunpack.c.l.b16 %v124
    %v428 = vunpack.c.l.b16 %v125
    %v429 = vunpack.c.l.b16 %v126
    %v430 = vunpack.c.l.b16 %v127
    %v431 = vunpack.c.l.b16 %v128
    %v432 = vunpack.c.l.b16 %v129
    %v433 = vunpack.c.l.b16 %v130
    %v434 = vunpack.c.l.b16 %v131
    %v435 = vunpack.c.l.b16 %v132
    %v436 = vunpack.c.l.b16 %v133
    %v437 = vunpack.c.l.b16 %v134
    %v438 = vunpack.c.l.b16 %v135
    %v439 = vunpack.c.l.b16 %v136
    %v440 = vunpack.c.l.b16 %v137
    %v441 = vunpack.c.l.b16 %v138
    %v442 = vunpack.c.l.b16 %v139
    %v443 = vunpack.c.l.b16 %v140
    %v444 = vunpack.c.l.b16 %v141
    %v445 = vunpack.c.l.b16 %v142
    %v446 = vunpack.c.l.b16 %v143
    %v447 = vunpack.c.l.b16 %v144
    %v448 = vunpack.c.l.b16 %v145
    %v449 = vunpack.c.l.b16 %v146
    %v450 = vunpack.c.l.b16 %v147
    %v451 = vunpack.c.l.b16 %v148
    %v452 = vunpack.c.l.b16 %v149
    %v453 = vunpack.c.l.b16 %v150
    %v454 = vunpack.c.l.b16 %v151
    %v455 = vunpack.c.l.b16 %v152
    %v456 = vunpack.c.l.b16 %v153
    %v457 = vunpack.c.l.b16 %v154
    %v458 = vunpack.c.l.b16 %v155
    %v459 = vunpack.c.l.b16 %v156
    %v460 = vunpack.c.l.b16 %v157
    %v461 = vunpack.c.l.b16 %v158
    %v462 = vunpack.c.l.b16 %v159
    %v463 = vunpack.c.l.b16 %v160
    %v464 = vunpack.c.l.b16 %v161
    %v465 = vunpack.c.l.b16 %v162
    %v466 = vunpack.c.l.b16 %v163
    %v467 = vunpack.c.l.b16 %v164
    %v468 = vunpack.c.l.b16 %v165
    %v469 = vunpack.c.l.b16 %v166
    %v470 = vunpack.c.l.b16 %v167
    %v471 = vunpack.c.l.b16 %v168
    %v472 = vunpack.c.l.b16 %v169
    %v473 = vunpack.c.l.b16 %v170
    %v474 = vunpack.c.l.b16 %v171
    %v475 = vunpack.c.l.b16 %v172
    %v476 = vpack.c.b16 %v349, %v348
    %v477 = vpack.c.b16 %v351, %v350
    %v478 = vpack.c.b16 %v353, %v352
    %v479 = vpack.c.b16 %v355, %v354
    %v480 = vpack.c.b16 %v357, %v356
    %v481 = vpack.c.b16 %v359, %v358
    %v482 = vpack.c.b16 %v361, %v360
    %v483 = vpack.c.b16 %v363, %v362
    %v484 = vpack.c.b16 %v365, %v364
    %v485 = vpack.c.b16 %v367, %v366
    %v486 = vpack.c.b16 %v369, %v368
    %v487 = vpack.c.b16 %v371, %v370
    %v488 = vpack.c.b16 %v373, %v372
    %v489 = vpack.c.b16 %v375, %v374
    %v490 = vpack.c.b16 %v377, %v376
    %v491 = vpack.c.b16 %v379, %v378
    %v492 = vpack.c.b16 %v381, %v380
    %v493 = vpack.c.b16 %v383, %v382
    %v494 = vpack.c.b16 %v385, %v384
    %v495 = vpack.c.b16 %v387, %v386
    %v496 = vpack.c.b16 %v389, %v388
    %v497 = vpack.c.b16 %v391, %v390
    %v498 = vpack.c.b16 %v393, %v392
    %v499 = vpack.c.b16 %v395, %v394
    %v500 = vpack.c.b16 %v397, %v396
    %v501 = vpack.c.b16 %v399, %v398
    %v502 = vpack.c.b16 %v401, %v400
    %v503 = vpack.c.b16 %v403, %v402
    %v504 = vpack.c.b16 %v405, %v404
    %v505 = vpack.c.b16 %v407, %v406
    %v506 = vpack.c.b16 %v409, %v408
    %v507 = vpack.c.b16 %v411, %v410
    %v508 = vpack.c.b16 %v413, %v412
    %v509 = vpack.c.b16 %v415, %v414
    %v510 = vpack.c.b16 %v417, %v416
    %v511 = vpack.c.b16 %v419, %v418
    %v512 = vpack.c.b16 %v421, %v420
    %v513 = vpack.c.b16 %v423, %v422
    %v514 = vpack.c.b16 %v425, %v424
    %v515 = vpack.c.b16 %v427, %v426
    %v516 = vpack.c.b16 %v429, %v428
    %v517 = vpack.c.b16 %v431, %v430
    %v518 = vpack.c.b16 %v433, %v432
    %v519 = vpack.c.b16 %v435, %v434
    %v520 = vpack.c.b16 %v437, %v436
    %v521 = vpack.c.b16 %v439, %v438
    %v522 = vpack.c.b16 %v441, %v440
    %v523 = vpack.c.b16 %v443, %v442
    %v524 = vpack.c.b16 %v445, %v444
    %v525 = vpack.c.b16 %v447, %v446
    %v526 = vpack.c.b16 %v449, %v448
    %v527 = vpack.c.b16 %v451, %v450
    %v528 = vpack.c.b16 %v453, %v452
    %v529 = vpack.c.b16 %v455, %v454
    %v530 = vpack.c.b16 %v457, %v456
    %v531 = vpack.c.b16 %v459, %v458
    %v532 = vpack.c.b16 %v461, %v460
    %v533 = vpack.c.b16 %v463, %v462
    %v534 = vpack.c.b16 %v465, %v464
    %v535 = vpack.c.b16 %v467, %v466
    %v536 = vpack.c.b16 %v469, %v468
    %v537 = vpack.c.b16 %v471, %v470
    %v538 = vpack.c.b16 %v473, %v472
    %v539 = vpack.c.b16 %v475, %v474
    %604 = vmatprep.subr.bf16.mxu0 0
    %605 = vmatpush1.bf16.msra.mxu0 %v483
    %606 = vmatprep.subr.bf16.mxu0 0
    %607 = vmatpush1.bf16.msra.mxu0 %v482
    %608 = vmatprep.subr.bf16.mxu0 0
    %609 = vmatpush1.bf16.msra.mxu0 %v481
    %610 = vmatprep.subr.bf16.mxu0 0
    %611 = vmatpush1.bf16.msra.mxu0 %v480
    %612 = vmatprep.subr.bf16.mxu0 0
    %613 = vmatpush1.bf16.msra.mxu0 %v479
    %614 = vmatprep.subr.bf16.mxu0 0
    %615 = vmatpush1.bf16.msra.mxu0 %v478
    %616 = vmatprep.subr.bf16.mxu0 0
    %617 = vmatpush1.bf16.msra.mxu0 %v477
    %618 = vmatprep.subr.bf16.mxu0 0
    %619 = vmatpush1.bf16.msra.mxu0 %v476
    %620 = vmatprep.subr.bf16.mxu0 0
    %621 = vmatpush2.bf16.msra.mxu0 %v491
    %622 = vmatprep.subr.bf16.mxu0 0
    %623 = vmatpush2.bf16.msra.mxu0 %v490
    %624 = vmatprep.subr.bf16.mxu0 0
    %625 = vmatpush2.bf16.msra.mxu0 %v489
    %626 = vmatprep.subr.bf16.mxu0 0
    %627 = vmatpush2.bf16.msra.mxu0 %v488
    %628 = vmatprep.subr.bf16.mxu0 0
    %629 = vmatpush2.bf16.msra.mxu0 %v487
    %630 = vmatprep.subr.bf16.mxu0 0
    %631 = vmatpush2.bf16.msra.mxu0 %v486
    %632 = vmatprep.subr.bf16.mxu0 0
    %633 = vmatpush2.bf16.msra.mxu0 %v485
    %634 = vmatprep.subr.bf16.mxu0 0
    %635 = vmatpush2.bf16.msra.mxu0 %v484
    %636 = vmatprep.mubr.bf16.mxu0 %v205
    %637 = vmatmul.mubr.bf16.gmra.mxu0 %v204
    %v638 = vpop.f32.mrf.mxu0
    %v639 = vadd.f32 %v178, %v638
    %v640 = vpop.f32.mrf.mxu0
    %v641 = vpop.f32.mrf.mxu0
    %v642 = vadd.f32 %v178, %v641
    %v643 = vpop.f32.mrf.mxu0
    %644 = vdwg.mxu0
    %645 = vmatprep.subr.bf16.mxu0 0
    %646 = vmatpush1.bf16.msra.mxu0 %v499
    %647 = vmatprep.subr.bf16.mxu0 0
    %648 = vmatpush1.bf16.msra.mxu0 %v498
    %649 = vmatprep.subr.bf16.mxu0 0
    %650 = vmatpush1.bf16.msra.mxu0 %v497
    %651 = vmatprep.subr.bf16.mxu0 0
    %652 = vmatpush1.bf16.msra.mxu0 %v496
    %653 = vmatprep.subr.bf16.mxu0 0
    %654 = vmatpush1.bf16.msra.mxu0 %v495
    %655 = vmatprep.subr.bf16.mxu0 0
    %656 = vmatpush1.bf16.msra.mxu0 %v494
    %657 = vmatprep.subr.bf16.mxu0 0
    %658 = vmatpush1.bf16.msra.mxu0 %v493
    %659 = vmatprep.subr.bf16.mxu0 0
    %660 = vmatpush1.bf16.msra.mxu0 %v492
    %661 = vmatprep.subr.bf16.mxu0 0
    %662 = vmatpush2.bf16.msra.mxu0 %v507
    %663 = vmatprep.subr.bf16.mxu0 0
    %664 = vmatpush2.bf16.msra.mxu0 %v506
    %665 = vmatprep.subr.bf16.mxu0 0
    %666 = vmatpush2.bf16.msra.mxu0 %v505
    %667 = vmatprep.subr.bf16.mxu0 0
    %668 = vmatpush2.bf16.msra.mxu0 %v504
    %669 = vmatprep.subr.bf16.mxu0 0
    %670 = vmatpush2.bf16.msra.mxu0 %v503
    %671 = vmatprep.subr.bf16.mxu0 0
    %672 = vmatpush2.bf16.msra.mxu0 %v502
    %673 = vmatprep.subr.bf16.mxu0 0
    %674 = vmatpush2.bf16.msra.mxu0 %v501
    %675 = vmatprep.subr.bf16.mxu0 0
    %676 = vmatpush2.bf16.msra.mxu0 %v500
    %677 = vmatprep.mubr.bf16.mxu0 %v207
    %678 = vmatmul.mubr.bf16.gmra.mxu0 %v206
    %v679 = vpop.f32.mrf.mxu0
    %v680 = vadd.f32 %v639, %v679
    %v681 = vpop.f32.mrf.mxu0
    %v682 = vpop.f32.mrf.mxu0
    %v683 = vadd.f32 %v642, %v682
    %v684 = vpop.f32.mrf.mxu0
    %685 = vdwg.mxu0
    %686 = vmatprep.subr.bf16.mxu0 0
    %687 = vmatpush1.bf16.msra.mxu0 %v515
    %688 = vmatprep.subr.bf16.mxu0 0
    %689 = vmatpush1.bf16.msra.mxu0 %v514
    %690 = vmatprep.subr.bf16.mxu0 0
    %691 = vmatpush1.bf16.msra.mxu0 %v513
    %692 = vmatprep.subr.bf16.mxu0 0
    %693 = vmatpush1.bf16.msra.mxu0 %v512
    %694 = vmatprep.subr.bf16.mxu0 0
    %695 = vmatpush1.bf16.msra.mxu0 %v511
    %696 = vmatprep.subr.bf16.mxu0 0
    %697 = vmatpush1.bf16.msra.mxu0 %v510
    %698 = vmatprep.subr.bf16.mxu0 0
    %699 = vmatpush1.bf16.msra.mxu0 %v509
    %700 = vmatprep.subr.bf16.mxu0 0
    %701 = vmatpush1.bf16.msra.mxu0 %v508
    %702 = vmatprep.subr.bf16.mxu0 0
    %703 = vmatpush2.bf16.msra.mxu0 %v523
    %704 = vmatprep.subr.bf16.mxu0 0
    %705 = vmatpush2.bf16.msra.mxu0 %v522
    %706 = vmatprep.subr.bf16.mxu0 0
    %707 = vmatpush2.bf16.msra.mxu0 %v521
    %708 = vmatprep.subr.bf16.mxu0 0
    %709 = vmatpush2.bf16.msra.mxu0 %v520
    %710 = vmatprep.subr.bf16.mxu0 0
    %711 = vmatpush2.bf16.msra.mxu0 %v519
    %712 = vmatprep.subr.bf16.mxu0 0
    %713 = vmatpush2.bf16.msra.mxu0 %v518
    %714 = vmatprep.subr.bf16.mxu0 0
    %715 = vmatpush2.bf16.msra.mxu0 %v517
    %716 = vmatprep.subr.bf16.mxu0 0
    %717 = vmatpush2.bf16.msra.mxu0 %v516
    %718 = vmatprep.mubr.bf16.mxu0 %v209
    %719 = vmatmul.mubr.bf16.gmra.mxu0 %v208
    %v720 = vpop.f32.mrf.mxu0
    %v721 = vadd.f32 %v680, %v720
    %v722 = vpop.f32.mrf.mxu0
    %v723 = vpop.f32.mrf.mxu0
    %v724 = vadd.f32 %v683, %v723
    %v725 = vpop.f32.mrf.mxu0
    %726 = vdwg.mxu0
    %727 = vmatprep.subr.bf16.mxu0 0
    %728 = vmatpush1.bf16.msra.mxu0 %v531
    %729 = vmatprep.subr.bf16.mxu0 0
    %730 = vmatpush1.bf16.msra.mxu0 %v530
    %731 = vmatprep.subr.bf16.mxu0 0
    %732 = vmatpush1.bf16.msra.mxu0 %v529
    %733 = vmatprep.subr.bf16.mxu0 0
    %734 = vmatpush1.bf16.msra.mxu0 %v528
    %735 = vmatprep.subr.bf16.mxu0 0
    %736 = vmatpush1.bf16.msra.mxu0 %v527
    %737 = vmatprep.subr.bf16.mxu0 0
    %738 = vmatpush1.bf16.msra.mxu0 %v526
    %739 = vmatprep.subr.bf16.mxu0 0
    %740 = vmatpush1.bf16.msra.mxu0 %v525
    %741 = vmatprep.subr.bf16.mxu0 0
    %742 = vmatpush1.bf16.msra.mxu0 %v524
    %743 = vmatprep.subr.bf16.mxu0 0
    %744 = vmatpush2.bf16.msra.mxu0 %v539
    %745 = vmatprep.subr.bf16.mxu0 0
    %746 = vmatpush2.bf16.msra.mxu0 %v538
    %747 = vmatprep.subr.bf16.mxu0 0
    %748 = vmatpush2.bf16.msra.mxu0 %v537
    %749 = vmatprep.subr.bf16.mxu0 0
    %750 = vmatpush2.bf16.msra.mxu0 %v536
    %751 = vmatprep.subr.bf16.mxu0 0
    %752 = vmatpush2.bf16.msra.mxu0 %v535
    %753 = vmatprep.subr.bf16.mxu0 0
    %754 = vmatpush2.bf16.msra.mxu0 %v534
    %755 = vmatprep.subr.bf16.mxu0 0
    %756 = vmatpush2.bf16.msra.mxu0 %v533
    %757 = vmatprep.subr.bf16.mxu0 0
    %758 = vmatpush2.bf16.msra.mxu0 %v532
    %759 = vmatprep.mubr.bf16.mxu0 %v211
    %760 = vmatmul.mubr.bf16.gmra.mxu0 %v210
    %v761 = vpop.f32.mrf.mxu0
    %v762 = vadd.f32 %v721, %v761
    %v763 = vpop.f32.mrf.mxu0
    %v764 = vpop.f32.mrf.mxu0
    %v765 = vadd.f32 %v724, %v764
    %v766 = vpop.f32.mrf.mxu0
    %767 = vdwg.mxu0
    %v768 = vld [vmem:[%s3] sm:$0xff]
    %v769 = vld [vmem:[%s3 + $0x8] sm:$0xff]
    %v770 = vld [vmem:[%s3 + $0x10] sm:$0xff]
    %v771 = vld [vmem:[%s3 + $0x18] sm:$0xff]
    %v772 = vld [vmem:[%s3 + $0x20] sm:$0xff]
    %v773 = vld [vmem:[%s3 + $0x28] sm:$0xff]
    %v774 = vld [vmem:[%s3 + $0x30] sm:$0xff]
    %v775 = vld [vmem:[%s3 + $0x38] sm:$0xff]
    %v776 = vld [vmem:[%s3 + $0x40] sm:$0xff]
    %v777 = vld [vmem:[%s3 + $0x48] sm:$0xff]
    %v778 = vld [vmem:[%s3 + $0x50] sm:$0xff]
    %v779 = vld [vmem:[%s3 + $0x58] sm:$0xff]
    %v780 = vld [vmem:[%s3 + $0x60] sm:$0xff]
    %v781 = vld [vmem:[%s3 + $0x68] sm:$0xff]
    %v782 = vld [vmem:[%s3 + $0x70] sm:$0xff]
    %v783 = vld [vmem:[%s3 + $0x78] sm:$0xff]
    %v784 = vld [vmem:[%s5] sm:$0x1]
    %v786 = vlaneseq
    %v787 = vshrl.u32 %v786, 7
    %v788 = vsub.s32 0, %v787
    %v789 = vrot.slane %v784, %v788
    %791 = vmatprep.subr.mxu0 0.0
    %792 = vmatpush1.msra.mxu0 %v783
    %793 = vmatprep.subr.mxu0 0.0
    %794 = vmatpush1.msra.mxu0 %v782
    %795 = vmatprep.subr.mxu0 0.0
    %796 = vmatpush1.msra.mxu0 %v781
    %797 = vmatprep.subr.mxu0 0.0
    %798 = vmatpush1.msra.mxu0 %v780
    %799 = vmatprep.subr.mxu0 0.0
    %800 = vmatpush1.msra.mxu0 %v779
    %801 = vmatprep.subr.mxu0 0.0
    %802 = vmatpush1.msra.mxu0 %v778
    %803 = vmatprep.subr.mxu0 0.0
    %804 = vmatpush1.msra.mxu0 %v777
    %805 = vmatprep.subr.mxu0 0.0
    %806 = vmatpush1.msra.mxu0 %v776
    %807 = vmatprep.subr.mxu0 0.0
    %808 = vmatpush1.msra.mxu0 %v775
    %809 = vmatprep.subr.mxu0 0.0
    %810 = vmatpush1.msra.mxu0 %v774
    %811 = vmatprep.subr.mxu0 0.0
    %812 = vmatpush1.msra.mxu0 %v773
    %813 = vmatprep.subr.mxu0 0.0
    %814 = vmatpush1.msra.mxu0 %v772
    %815 = vmatprep.subr.mxu0 0.0
    %816 = vmatpush1.msra.mxu0 %v771
    %817 = vmatprep.subr.mxu0 0.0
    %818 = vmatpush1.msra.mxu0 %v770
    %819 = vmatprep.subr.mxu0 0.0
    %820 = vmatpush1.msra.mxu0 %v769
    %821 = vmatprep.subr.mxu0 0.0
    %822 = vmatpush1.msra.mxu0 %v768
    %823 = vmatprep.subr.mxu0 0.0
    %824 = vmatpush2.msra.mxu0 0.0
    %825 = vmatprep.subr.mxu0 0.0
    %826 = vmatpush2.msra.mxu0 0.0
    %827 = vmatprep.subr.mxu0 0.0
    %828 = vmatpush2.msra.mxu0 0.0
    %829 = vmatprep.subr.mxu0 0.0
    %830 = vmatpush2.msra.mxu0 0.0
    %831 = vmatprep.subr.mxu0 0.0
    %832 = vmatpush2.msra.mxu0 0.0
    %833 = vmatprep.subr.mxu0 0.0
    %834 = vmatpush2.msra.mxu0 0.0
    %835 = vmatprep.subr.mxu0 0.0
    %836 = vmatpush2.msra.mxu0 0.0
    %837 = vmatprep.subr.mxu0 0.0
    %838 = vmatpush2.msra.mxu0 0.0
    %839 = vmatprep.subr.mxu0 0.0
    %840 = vmatpush2.msra.mxu0 0.0
    %841 = vmatprep.subr.mxu0 0.0
    %842 = vmatpush2.msra.mxu0 0.0
    %843 = vmatprep.subr.mxu0 0.0
    %844 = vmatpush2.msra.mxu0 0.0
    %845 = vmatprep.subr.mxu0 0.0
    %846 = vmatpush2.msra.mxu0 0.0
    %847 = vmatprep.subr.mxu0 0.0
    %848 = vmatpush2.msra.mxu0 0.0
    %849 = vmatprep.subr.mxu0 0.0
    %850 = vmatpush2.msra.mxu0 0.0
    %851 = vmatprep.subr.mxu0 0.0
    %852 = vmatpush2.msra.mxu0 0.0
    %853 = vmatprep.subr.mxu0 0.0
    %854 = vmatpush2.msra.mxu0 0.0
    %855 = vmatprep.mubr.f32.mxu0 0.0
    %856 = vmatmul.mubr.f32.gmra.mxu0 %v762
    %v857 = vpop.f32.mrf.mxu0
    %v858 = vadd.f32 %v789, %v857
    %v859 = vpop.f32.mrf.mxu0
    %860 = vmatprep.mubr.f32.mxu0 0.0
    %861 = vmatmul.mubr.f32.gmra.mxu0 %v765
    %v862 = vpop.f32.mrf.mxu0
    %v863 = vadd.f32 %v789, %v862
    %v864 = vpop.f32.mrf.mxu0
    %865 = vdwg.mxu0
    %s866 = smul.u32 0, 16
    %s867 = scalar_lea.vmem [#allocation2], %s866
    %868 = vst [vmem:[%s867] sm:$0xff] %v858
    %869 = vst [vmem:[%s867 + $0x8] sm:$0xff] %v863
    %p870 = scmp.eq.s32.totalorder 0, 0
    // Predicated region
    $region42: #{face_classifier_lstm.1} parent=1 // pred_check
      %p871 = pneg %p870
    $region43: #{face_classifier_lstm.1} parent=1 // pred_check_branch
      %873 = sbr.rel (%p871) target = $region45
    $region44: #{face_classifier_lstm.1} parent=1 // pred_region
      %v874 = vld [vmem:[#allocation2] sm:$0xff]
      %v875 = vld [vmem:[#allocation2 + $0x8] sm:$0xff]
      %v876 = vld [vmem:[%s4] sm:$0xff]
      %v877 = vld [vmem:[%s4 + $0x8] sm:$0xff]
      %v878 = vld [vmem:[%s4 + $0x10] sm:$0xff]
      %v879 = vld [vmem:[%s4 + $0x18] sm:$0xff]
      %vm880 = vcmask 261120
      %v882 = vsel %vm880, 0.0, 0
      %884 = vmatprep.subr.mxu0 0.0
      %885 = vmatpush1.msra.mxu0 0.0
      %886 = vmatprep.subr.mxu0 0.0
      %887 = vmatpush1.msra.mxu0 0.0
      %888 = vmatprep.subr.mxu0 0.0
      %889 = vmatpush1.msra.mxu0 0.0
      %890 = vmatprep.subr.mxu0 0.0
      %891 = vmatpush1.msra.mxu0 0.0
      %892 = vmatprep.subr.mxu0 0.0
      %893 = vmatpush1.msra.mxu0 0.0
      %894 = vmatprep.subr.mxu0 0.0
      %895 = vmatpush1.msra.mxu0 0.0
      %896 = vmatprep.subr.mxu0 0.0
      %897 = vmatpush1.msra.mxu0 0.0
      %898 = vmatprep.subr.mxu0 0.0
      %899 = vmatpush1.msra.mxu0 0.0
      %900 = vmatprep.subr.mxu0 0.0
      %901 = vmatpush1.msra.mxu0 0.0
      %902 = vmatprep.subr.mxu0 0.0
      %903 = vmatpush1.msra.mxu0 0.0
      %904 = vmatprep.subr.mxu0 0.0
      %905 = vmatpush1.msra.mxu0 0.0
      %906 = vmatprep.subr.mxu0 0.0
      %907 = vmatpush1.msra.mxu0 0.0
      %908 = vmatprep.subr.mxu0 0.0
      %909 = vmatpush1.msra.mxu0 %v879
      %910 = vmatprep.subr.mxu0 0.0
      %911 = vmatpush1.msra.mxu0 %v878
      %912 = vmatprep.subr.mxu0 0.0
      %913 = vmatpush1.msra.mxu0 %v877
      %914 = vmatprep.subr.mxu0 0.0
      %915 = vmatpush1.msra.mxu0 %v876
      %916 = vmatprep.subr.mxu0 0.0
      %917 = vmatpush2.msra.mxu0 0.0
      %918 = vmatprep.subr.mxu0 0.0
      %919 = vmatpush2.msra.mxu0 0.0
      %920 = vmatprep.subr.mxu0 0.0
      %921 = vmatpush2.msra.mxu0 0.0
      %922 = vmatprep.subr.mxu0 0.0
      %923 = vmatpush2.msra.mxu0 0.0
      %924 = vmatprep.subr.mxu0 0.0
      %925 = vmatpush2.msra.mxu0 0.0
      %926 = vmatprep.subr.mxu0 0.0
      %927 = vmatpush2.msra.mxu0 0.0
      %928 = vmatprep.subr.mxu0 0.0
      %929 = vmatpush2.msra.mxu0 0.0
      %930 = vmatprep.subr.mxu0 0.0
      %931 = vmatpush2.msra.mxu0 0.0
      %932 = vmatprep.subr.mxu0 0.0
      %933 = vmatpush2.msra.mxu0 0.0
      %934 = vmatprep.subr.mxu0 0.0
      %935 = vmatpush2.msra.mxu0 0.0
      %936 = vmatprep.subr.mxu0 0.0
      %937 = vmatpush2.msra.mxu0 0.0
      %938 = vmatprep.subr.mxu0 0.0
      %939 = vmatpush2.msra.mxu0 0.0
      %940 = vmatprep.subr.mxu0 0.0
      %941 = vmatpush2.msra.mxu0 0.0
      %942 = vmatprep.subr.mxu0 0.0
      %943 = vmatpush2.msra.mxu0 0.0
      %944 = vmatprep.subr.mxu0 0.0
      %945 = vmatpush2.msra.mxu0 0.0
      %946 = vmatprep.subr.mxu0 0.0
      %947 = vmatpush2.msra.mxu0 0.0
      %948 = vmatprep.mubr.f32.mxu0 0.0
      %949 = vmatmul.mubr.f32.gmra.mxu0 %v882
      %v950 = vpop.f32.mrf.mxu0
      %v951 = vadd.f32 0.0, %v950
      %v952 = vpop.f32.mrf.mxu0
      %953 = vdwg.mxu0
      %v955 = vrot.slane %v951, 1
      %v958 = vadd.f32 %v874, %v951
      %v959 = vadd.f32 %v875, %v955
      %v960 = vxor.u32 %v958, 2147483648
      %v961 = vxor.u32 %v959, 2147483648
      %v962 = vmul.f32 %v960, 1.442695
      %v963 = vpow.pop %v962
      %v964 = vmul.f32 %v961, 1.442695
      %v965 = vpow.pop %v964
      %v966 = vadd.f32 %v963, 1.0
      %v967 = vadd.f32 %v965, 1.0
      %v968 = vrcp.pop %v966
      %v969 = vmul.f32 1.0, %v968
      %v970 = vrcp.pop %v967
      %v971 = vmul.f32 1.0, %v970
      %v972 = vtanh.pop %v958
      %v973 = vtanh.pop %v959
      %v974 = vmul.f32 %v969, 0.0
      %v975 = vmul.f32 %v971, 0.0
      %978 = vrot.lane.b32.xlu0 %v972, 64
      %v979 = vpop.permute.xlu0 %978
      %980 = vrot.lane.b32.xlu0 %v973, 64
      %v981 = vpop.permute.xlu0 %980
      %v984 = vmul.f32 %v969, %v979
      %v985 = vmul.f32 %v971, %v981
      %988 = vrot.lane.b32.xlu0 %v984, 32
      %v989 = vpop.permute.xlu0 %988
      %990 = vrot.lane.b32.xlu0 %v985, 32
      %v991 = vpop.permute.xlu0 %990
      %v994 = vadd.f32 %v974, %v989
      %v995 = vadd.f32 %v975, %v991
      %v996 = vtanh.pop %v994
      %v997 = vtanh.pop %v995
      %1000 = vrot.lane.b32.xlu0 %v996, 64
      %v1001 = vpop.permute.xlu0 %1000
      %1002 = vrot.lane.b32.xlu0 %v997, 64
      %v1003 = vpop.permute.xlu0 %1002
      %v1006 = vmul.f32 %v969, %v1001
      %v1007 = vmul.f32 %v971, %v1003
      %v1008 = vadd.f32 %v1006, 0.0
      %v1009 = vadd.f32 %v1007, 0.0
      %v1012 = vrot.slane %v1007, 7
      %vm1013 = vcmask 1041409
      %v1014 = vsel %vm1013, %v1012, %v1006
      %1015 = vrot.lane.b32.xlu0 %v1014, 32
      %v1016 = vpop.permute.xlu0 %1015
      %v1017 = vsel %vm880, %v1016, 0
      %1019 = vmatprep.subr.mxu0 0.0
      %1020 = vmatpush1.msra.mxu0 0.0
      %1021 = vmatprep.subr.mxu0 0.0
      %1022 = vmatpush1.msra.mxu0 0.0
      %1023 = vmatprep.subr.mxu0 0.0
      %1024 = vmatpush1.msra.mxu0 0.0
      %1025 = vmatprep.subr.mxu0 0.0
      %1026 = vmatpush1.msra.mxu0 0.0
      %1027 = vmatprep.subr.mxu0 0.0
      %1028 = vmatpush1.msra.mxu0 0.0
      %1029 = vmatprep.subr.mxu0 0.0
      %1030 = vmatpush1.msra.mxu0 0.0
      %1031 = vmatprep.subr.mxu0 0.0
      %1032 = vmatpush1.msra.mxu0 0.0
      %1033 = vmatprep.subr.mxu0 0.0
      %1034 = vmatpush1.msra.mxu0 0.0
      %1035 = vmatprep.subr.mxu0 0.0
      %1036 = vmatpush1.msra.mxu0 0.0
      %1037 = vmatprep.subr.mxu0 0.0
      %1038 = vmatpush1.msra.mxu0 0.0
      %1039 = vmatprep.subr.mxu0 0.0
      %1040 = vmatpush1.msra.mxu0 0.0
      %1041 = vmatprep.subr.mxu0 0.0
      %1042 = vmatpush1.msra.mxu0 0.0
      %1043 = vmatprep.subr.mxu0 0.0
      %1044 = vmatpush1.msra.mxu0 %v879
      %1045 = vmatprep.subr.mxu0 0.0
      %1046 = vmatpush1.msra.mxu0 %v878
      %1047 = vmatprep.subr.mxu0 0.0
      %1048 = vmatpush1.msra.mxu0 %v877
      %1049 = vmatprep.subr.mxu0 0.0
      %1050 = vmatpush1.msra.mxu0 %v876
      %1051 = vmatprep.subr.mxu0 0.0
      %1052 = vmatpush2.msra.mxu0 0.0
      %1053 = vmatprep.subr.mxu0 0.0
      %1054 = vmatpush2.msra.mxu0 0.0
      %1055 = vmatprep.subr.mxu0 0.0
      %1056 = vmatpush2.msra.mxu0 0.0
      %1057 = vmatprep.subr.mxu0 0.0
      %1058 = vmatpush2.msra.mxu0 0.0
      %1059 = vmatprep.subr.mxu0 0.0
      %1060 = vmatpush2.msra.mxu0 0.0
      %1061 = vmatprep.subr.mxu0 0.0
      %1062 = vmatpush2.msra.mxu0 0.0
      %1063 = vmatprep.subr.mxu0 0.0
      %1064 = vmatpush2.msra.mxu0 0.0
      %1065 = vmatprep.subr.mxu0 0.0
      %1066 = vmatpush2.msra.mxu0 0.0
      %1067 = vmatprep.subr.mxu0 0.0
      %1068 = vmatpush2.msra.mxu0 0.0
      %1069 = vmatprep.subr.mxu0 0.0
      %1070 = vmatpush2.msra.mxu0 0.0
      %1071 = vmatprep.subr.mxu0 0.0
      %1072 = vmatpush2.msra.mxu0 0.0
      %1073 = vmatprep.subr.mxu0 0.0
      %1074 = vmatpush2.msra.mxu0 0.0
      %1075 = vmatprep.subr.mxu0 0.0
      %1076 = vmatpush2.msra.mxu0 0.0
      %1077 = vmatprep.subr.mxu0 0.0
      %1078 = vmatpush2.msra.mxu0 0.0
      %1079 = vmatprep.subr.mxu0 0.0
      %1080 = vmatpush2.msra.mxu0 0.0
      %1081 = vmatprep.subr.mxu0 0.0
      %1082 = vmatpush2.msra.mxu0 0.0
      %1083 = vmatprep.mubr.f32.mxu0 0.0
      %1084 = vmatmul.mubr.f32.gmra.mxu0 %v1017
      %v1085 = vpop.f32.mrf.mxu0
      %v1086 = vadd.f32 0.0, %v1085
      %v1087 = vpop.f32.mrf.mxu0
      %1088 = vdwg.mxu0
      %v1090 = vrot.slane %v1086, 7
      %v1093 = vadd.f32 %v874, %v1090
      %v1094 = vadd.f32 %v875, %v1086
      %v1095 = vxor.u32 %v1093, 2147483648
      %v1096 = vxor.u32 %v1094, 2147483648
      %v1097 = vmul.f32 %v1095, 1.442695
      %v1098 = vpow.pop %v1097
      %v1099 = vmul.f32 %v1096, 1.442695
      %v1100 = vpow.pop %v1099
      %v1101 = vadd.f32 %v1098, 1.0
      %v1102 = vadd.f32 %v1100, 1.0
      %v1103 = vrcp.pop %v1101
      %v1104 = vmul.f32 1.0, %v1103
      %v1105 = vrcp.pop %v1102
      %v1106 = vmul.f32 1.0, %v1105
      %v1107 = vtanh.pop %v1093
      %v1108 = vtanh.pop %v1094
      %v1111 = vrot.slane %v994, 7
      %v1112 = vrot.slane %v995, 7
      %v1115 = vmul.f32 %v1104, %v1111
      %v1116 = vmul.f32 %v1106, %v1112
      %1119 = vrot.lane.b32.xlu0 %v1107, 64
      %v1120 = vpop.permute.xlu0 %1119
      %1121 = vrot.lane.b32.xlu0 %v1108, 64
      %v1122 = vpop.permute.xlu0 %1121
      %v1125 = vmul.f32 %v1104, %v1120
      %v1126 = vmul.f32 %v1106, %v1122
      %1129 = vrot.lane.b32.xlu0 %v1125, 32
      %v1130 = vpop.permute.xlu0 %1129
      %1131 = vrot.lane.b32.xlu0 %v1126, 32
      %v1132 = vpop.permute.xlu0 %1131
      %v1135 = vadd.f32 %v1115, %v1130
      %v1136 = vadd.f32 %v1116, %v1132
      %v1137 = vtanh.pop %v1135
      %v1138 = vtanh.pop %v1136
      %1141 = vrot.lane.b32.xlu0 %v1137, 64
      %v1142 = vpop.permute.xlu0 %1141
      %1143 = vrot.lane.b32.xlu0 %v1138, 64
      %v1144 = vpop.permute.xlu0 %1143
      %v1147 = vmul.f32 %v1104, %v1142
      %v1148 = vmul.f32 %v1106, %v1144
      %v1151 = vrot.slane %v1147, 1
      %v1152 = vrot.slane %v1148, 1
      %v1155 = vadd.f32 %v1008, %v1151
      %v1156 = vadd.f32 %v1009, %v1152
      %v1157 = vsel %vm1013, %v1148, %v1151
      %1158 = vrot.lane.b32.xlu0 %v1157, 32
      %v1159 = vpop.permute.xlu0 %1158
      %v1160 = vsel %vm880, %v1159, 0
      %1162 = vmatprep.subr.mxu0 0.0
      %1163 = vmatpush1.msra.mxu0 0.0
      %1164 = vmatprep.subr.mxu0 0.0
      %1165 = vmatpush1.msra.mxu0 0.0
      %1166 = vmatprep.subr.mxu0 0.0
      %1167 = vmatpush1.msra.mxu0 0.0
      %1168 = vmatprep.subr.mxu0 0.0
      %1169 = vmatpush1.msra.mxu0 0.0
      %1170 = vmatprep.subr.mxu0 0.0
      %1171 = vmatpush1.msra.mxu0 0.0
      %1172 = vmatprep.subr.mxu0 0.0
      %1173 = vmatpush1.msra.mxu0 0.0
      %1174 = vmatprep.subr.mxu0 0.0
      %1175 = vmatpush1.msra.mxu0 0.0
      %1176 = vmatprep.subr.mxu0 0.0
      %1177 = vmatpush1.msra.mxu0 0.0
      %1178 = vmatprep.subr.mxu0 0.0
      %1179 = vmatpush1.msra.mxu0 0.0
      %1180 = vmatprep.subr.mxu0 0.0
      %1181 = vmatpush1.msra.mxu0 0.0
      %1182 = vmatprep.subr.mxu0 0.0
      %1183 = vmatpush1.msra.mxu0 0.0
      %1184 = vmatprep.subr.mxu0 0.0
      %1185 = vmatpush1.msra.mxu0 0.0
      %1186 = vmatprep.subr.mxu0 0.0
      %1187 = vmatpush1.msra.mxu0 %v879
      %1188 = vmatprep.subr.mxu0 0.0
      %1189 = vmatpush1.msra.mxu0 %v878
      %1190 = vmatprep.subr.mxu0 0.0
      %1191 = vmatpush1.msra.mxu0 %v877
      %1192 = vmatprep.subr.mxu0 0.0
      %1193 = vmatpush1.msra.mxu0 %v876
      %1194 = vmatprep.subr.mxu0 0.0
      %1195 = vmatpush2.msra.mxu0 0.0
      %1196 = vmatprep.subr.mxu0 0.0
      %1197 = vmatpush2.msra.mxu0 0.0
      %1198 = vmatprep.subr.mxu0 0.0
      %1199 = vmatpush2.msra.mxu0 0.0
      %1200 = vmatprep.subr.mxu0 0.0
      %1201 = vmatpush2.msra.mxu0 0.0
      %1202 = vmatprep.subr.mxu0 0.0
      %1203 = vmatpush2.msra.mxu0 0.0
      %1204 = vmatprep.subr.mxu0 0.0
      %1205 = vmatpush2.msra.mxu0 0.0
      %1206 = vmatprep.subr.mxu0 0.0
      %1207 = vmatpush2.msra.mxu0 0.0
      %1208 = vmatprep.subr.mxu0 0.0
      %1209 = vmatpush2.msra.mxu0 0.0
      %1210 = vmatprep.subr.mxu0 0.0
      %1211 = vmatpush2.msra.mxu0 0.0
      %1212 = vmatprep.subr.mxu0 0.0
      %1213 = vmatpush2.msra.mxu0 0.0
      %1214 = vmatprep.subr.mxu0 0.0
      %1215 = vmatpush2.msra.mxu0 0.0
      %1216 = vmatprep.subr.mxu0 0.0
      %1217 = vmatpush2.msra.mxu0 0.0
      %1218 = vmatprep.subr.mxu0 0.0
      %1219 = vmatpush2.msra.mxu0 0.0
      %1220 = vmatprep.subr.mxu0 0.0
      %1221 = vmatpush2.msra.mxu0 0.0
      %1222 = vmatprep.subr.mxu0 0.0
      %1223 = vmatpush2.msra.mxu0 0.0
      %1224 = vmatprep.subr.mxu0 0.0
      %1225 = vmatpush2.msra.mxu0 0.0
      %1226 = vmatprep.mubr.f32.mxu0 0.0
      %1227 = vmatmul.mubr.f32.gmra.mxu0 %v1160
      %v1228 = vpop.f32.mrf.mxu0
      %v1229 = vadd.f32 0.0, %v1228
      %v1230 = vpop.f32.mrf.mxu0
      %1231 = vdwg.mxu0
      %v1233 = vrot.slane %v1229, 6
      %v1234 = vrot.slane %v1229, 7
      %v1237 = vadd.f32 %v874, %v1233
      %v1238 = vadd.f32 %v875, %v1234
      %v1239 = vxor.u32 %v1237, 2147483648
      %v1240 = vxor.u32 %v1238, 2147483648
      %v1241 = vmul.f32 %v1239, 1.442695
      %v1242 = vpow.pop %v1241
      %v1243 = vmul.f32 %v1240, 1.442695
      %v1244 = vpow.pop %v1243
      %v1245 = vadd.f32 %v1242, 1.0
      %v1246 = vadd.f32 %v1244, 1.0
      %v1247 = vrcp.pop %v1245
      %v1248 = vmul.f32 1.0, %v1247
      %v1249 = vrcp.pop %v1246
      %v1250 = vmul.f32 1.0, %v1249
      %v1251 = vtanh.pop %v1237
      %v1252 = vtanh.pop %v1238
      %v1255 = vrot.slane %v1135, 7
      %v1256 = vrot.slane %v1136, 7
      %v1259 = vmul.f32 %v1248, %v1255
      %v1260 = vmul.f32 %v1250, %v1256
      %1263 = vrot.lane.b32.xlu0 %v1251, 64
      %v1264 = vpop.permute.xlu0 %1263
      %1265 = vrot.lane.b32.xlu0 %v1252, 64
      %v1266 = vpop.permute.xlu0 %1265
      %v1269 = vmul.f32 %v1248, %v1264
      %v1270 = vmul.f32 %v1250, %v1266
      %1273 = vrot.lane.b32.xlu0 %v1269, 32
      %v1274 = vpop.permute.xlu0 %1273
      %1275 = vrot.lane.b32.xlu0 %v1270, 32
      %v1276 = vpop.permute.xlu0 %1275
      %v1279 = vadd.f32 %v1259, %v1274
      %v1280 = vadd.f32 %v1260, %v1276
      %v1281 = vtanh.pop %v1279
      %v1282 = vtanh.pop %v1280
      %1285 = vrot.lane.b32.xlu0 %v1281, 64
      %v1286 = vpop.permute.xlu0 %1285
      %1287 = vrot.lane.b32.xlu0 %v1282, 64
      %v1288 = vpop.permute.xlu0 %1287
      %v1291 = vmul.f32 %v1248, %v1286
      %v1292 = vmul.f32 %v1250, %v1288
      %v1295 = vrot.slane %v1291, 2
      %v1296 = vrot.slane %v1292, 2
      %v1299 = vadd.f32 %v1155, %v1295
      %v1300 = vadd.f32 %v1156, %v1296
      %v1301 = vrot.slane %v1292, 1
      %v1302 = vsel %vm1013, %v1301, %v1295
      %1303 = vrot.lane.b32.xlu0 %v1302, 32
      %v1304 = vpop.permute.xlu0 %1303
      %v1305 = vsel %vm880, %v1304, 0
      %1307 = vmatprep.subr.mxu0 0.0
      %1308 = vmatpush1.msra.mxu0 0.0
      %1309 = vmatprep.subr.mxu0 0.0
      %1310 = vmatpush1.msra.mxu0 0.0
      %1311 = vmatprep.subr.mxu0 0.0
      %1312 = vmatpush1.msra.mxu0 0.0
      %1313 = vmatprep.subr.mxu0 0.0
      %1314 = vmatpush1.msra.mxu0 0.0
      %1315 = vmatprep.subr.mxu0 0.0
      %1316 = vmatpush1.msra.mxu0 0.0
      %1317 = vmatprep.subr.mxu0 0.0
      %1318 = vmatpush1.msra.mxu0 0.0
      %1319 = vmatprep.subr.mxu0 0.0
      %1320 = vmatpush1.msra.mxu0 0.0
      %1321 = vmatprep.subr.mxu0 0.0
      %1322 = vmatpush1.msra.mxu0 0.0
      %1323 = vmatprep.subr.mxu0 0.0
      %1324 = vmatpush1.msra.mxu0 0.0
      %1325 = vmatprep.subr.mxu0 0.0
      %1326 = vmatpush1.msra.mxu0 0.0
      %1327 = vmatprep.subr.mxu0 0.0
      %1328 = vmatpush1.msra.mxu0 0.0
      %1329 = vmatprep.subr.mxu0 0.0
      %1330 = vmatpush1.msra.mxu0 0.0
      %1331 = vmatprep.subr.mxu0 0.0
      %1332 = vmatpush1.msra.mxu0 %v879
      %1333 = vmatprep.subr.mxu0 0.0
      %1334 = vmatpush1.msra.mxu0 %v878
      %1335 = vmatprep.subr.mxu0 0.0
      %1336 = vmatpush1.msra.mxu0 %v877
      %1337 = vmatprep.subr.mxu0 0.0
      %1338 = vmatpush1.msra.mxu0 %v876
      %1339 = vmatprep.subr.mxu0 0.0
      %1340 = vmatpush2.msra.mxu0 0.0
      %1341 = vmatprep.subr.mxu0 0.0
      %1342 = vmatpush2.msra.mxu0 0.0
      %1343 = vmatprep.subr.mxu0 0.0
      %1344 = vmatpush2.msra.mxu0 0.0
      %1345 = vmatprep.subr.mxu0 0.0
      %1346 = vmatpush2.msra.mxu0 0.0
      %1347 = vmatprep.subr.mxu0 0.0
      %1348 = vmatpush2.msra.mxu0 0.0
      %1349 = vmatprep.subr.mxu0 0.0
      %1350 = vmatpush2.msra.mxu0 0.0
      %1351 = vmatprep.subr.mxu0 0.0
      %1352 = vmatpush2.msra.mxu0 0.0
      %1353 = vmatprep.subr.mxu0 0.0
      %1354 = vmatpush2.msra.mxu0 0.0
      %1355 = vmatprep.subr.mxu0 0.0
      %1356 = vmatpush2.msra.mxu0 0.0
      %1357 = vmatprep.subr.mxu0 0.0
      %1358 = vmatpush2.msra.mxu0 0.0
      %1359 = vmatprep.subr.mxu0 0.0
      %1360 = vmatpush2.msra.mxu0 0.0
      %1361 = vmatprep.subr.mxu0 0.0
      %1362 = vmatpush2.msra.mxu0 0.0
      %1363 = vmatprep.subr.mxu0 0.0
      %1364 = vmatpush2.msra.mxu0 0.0
      %1365 = vmatprep.subr.mxu0 0.0
      %1366 = vmatpush2.msra.mxu0 0.0
      %1367 = vmatprep.subr.mxu0 0.0
      %1368 = vmatpush2.msra.mxu0 0.0
      %1369 = vmatprep.subr.mxu0 0.0
      %1370 = vmatpush2.msra.mxu0 0.0
      %1371 = vmatprep.mubr.f32.mxu0 0.0
      %1372 = vmatmul.mubr.f32.gmra.mxu0 %v1305
      %v1373 = vpop.f32.mrf.mxu0
      %v1374 = vadd.f32 0.0, %v1373
      %v1375 = vpop.f32.mrf.mxu0
      %1376 = vdwg.mxu0
      %v1378 = vrot.slane %v1374, 5
      %v1379 = vrot.slane %v1374, 6
      %v1382 = vadd.f32 %v874, %v1378
      %v1383 = vadd.f32 %v875, %v1379
      %v1384 = vxor.u32 %v1382, 2147483648
      %v1385 = vxor.u32 %v1383, 2147483648
      %v1386 = vmul.f32 %v1384, 1.442695
      %v1387 = vpow.pop %v1386
      %v1388 = vmul.f32 %v1385, 1.442695
      %v1389 = vpow.pop %v1388
      %v1390 = vadd.f32 %v1387, 1.0
      %v1391 = vadd.f32 %v1389, 1.0
      %v1392 = vrcp.pop %v1390
      %v1393 = vmul.f32 1.0, %v1392
      %v1394 = vrcp.pop %v1391
      %v1395 = vmul.f32 1.0, %v1394
      %v1396 = vtanh.pop %v1382
      %v1397 = vtanh.pop %v1383
      %v1400 = vrot.slane %v1279, 7
      %v1401 = vrot.slane %v1280, 7
      %v1404 = vmul.f32 %v1393, %v1400
      %v1405 = vmul.f32 %v1395, %v1401
      %1408 = vrot.lane.b32.xlu0 %v1396, 64
      %v1409 = vpop.permute.xlu0 %1408
      %1410 = vrot.lane.b32.xlu0 %v1397, 64
      %v1411 = vpop.permute.xlu0 %1410
      %v1414 = vmul.f32 %v1393, %v1409
      %v1415 = vmul.f32 %v1395, %v1411
      %1418 = vrot.lane.b32.xlu0 %v1414, 32
      %v1419 = vpop.permute.xlu0 %1418
      %1420 = vrot.lane.b32.xlu0 %v1415, 32
      %v1421 = vpop.permute.xlu0 %1420
      %v1424 = vadd.f32 %v1404, %v1419
      %v1425 = vadd.f32 %v1405, %v1421
      %v1426 = vtanh.pop %v1424
      %v1427 = vtanh.pop %v1425
      %1430 = vrot.lane.b32.xlu0 %v1426, 64
      %v1431 = vpop.permute.xlu0 %1430
      %1432 = vrot.lane.b32.xlu0 %v1427, 64
      %v1433 = vpop.permute.xlu0 %1432
      %v1436 = vmul.f32 %v1393, %v1431
      %v1437 = vmul.f32 %v1395, %v1433
      %v1440 = vrot.slane %v1436, 3
      %v1441 = vrot.slane %v1437, 3
      %v1444 = vadd.f32 %v1299, %v1440
      %v1445 = vadd.f32 %v1300, %v1441
      %v1446 = vrot.slane %v1437, 2
      %v1447 = vsel %vm1013, %v1446, %v1440
      %1448 = vrot.lane.b32.xlu0 %v1447, 32
      %v1449 = vpop.permute.xlu0 %1448
      %v1450 = vsel %vm880, %v1449, 0
      %1452 = vmatprep.subr.mxu0 0.0
      %1453 = vmatpush1.msra.mxu0 0.0
      %1454 = vmatprep.subr.mxu0 0.0
      %1455 = vmatpush1.msra.mxu0 0.0
      %1456 = vmatprep.subr.mxu0 0.0
      %1457 = vmatpush1.msra.mxu0 0.0
      %1458 = vmatprep.subr.mxu0 0.0
      %1459 = vmatpush1.msra.mxu0 0.0
      %1460 = vmatprep.subr.mxu0 0.0
      %1461 = vmatpush1.msra.mxu0 0.0
      %1462 = vmatprep.subr.mxu0 0.0
      %1463 = vmatpush1.msra.mxu0 0.0
      %1464 = vmatprep.subr.mxu0 0.0
      %1465 = vmatpush1.msra.mxu0 0.0
      %1466 = vmatprep.subr.mxu0 0.0
      %1467 = vmatpush1.msra.mxu0 0.0
      %1468 = vmatprep.subr.mxu0 0.0
      %1469 = vmatpush1.msra.mxu0 0.0
      %1470 = vmatprep.subr.mxu0 0.0
      %1471 = vmatpush1.msra.mxu0 0.0
      %1472 = vmatprep.subr.mxu0 0.0
      %1473 = vmatpush1.msra.mxu0 0.0
      %1474 = vmatprep.subr.mxu0 0.0
      %1475 = vmatpush1.msra.mxu0 0.0
      %1476 = vmatprep.subr.mxu0 0.0
      %1477 = vmatpush1.msra.mxu0 %v879
      %1478 = vmatprep.subr.mxu0 0.0
      %1479 = vmatpush1.msra.mxu0 %v878
      %1480 = vmatprep.subr.mxu0 0.0
      %1481 = vmatpush1.msra.mxu0 %v877
      %1482 = vmatprep.subr.mxu0 0.0
      %1483 = vmatpush1.msra.mxu0 %v876
      %1484 = vmatprep.subr.mxu0 0.0
      %1485 = vmatpush2.msra.mxu0 0.0
      %1486 = vmatprep.subr.mxu0 0.0
      %1487 = vmatpush2.msra.mxu0 0.0
      %1488 = vmatprep.subr.mxu0 0.0
      %1489 = vmatpush2.msra.mxu0 0.0
      %1490 = vmatprep.subr.mxu0 0.0
      %1491 = vmatpush2.msra.mxu0 0.0
      %1492 = vmatprep.subr.mxu0 0.0
      %1493 = vmatpush2.msra.mxu0 0.0
      %1494 = vmatprep.subr.mxu0 0.0
      %1495 = vmatpush2.msra.mxu0 0.0
      %1496 = vmatprep.subr.mxu0 0.0
      %1497 = vmatpush2.msra.mxu0 0.0
      %1498 = vmatprep.subr.mxu0 0.0
      %1499 = vmatpush2.msra.mxu0 0.0
      %1500 = vmatprep.subr.mxu0 0.0
      %1501 = vmatpush2.msra.mxu0 0.0
      %1502 = vmatprep.subr.mxu0 0.0
      %1503 = vmatpush2.msra.mxu0 0.0
      %1504 = vmatprep.subr.mxu0 0.0
      %1505 = vmatpush2.msra.mxu0 0.0
      %1506 = vmatprep.subr.mxu0 0.0
      %1507 = vmatpush2.msra.mxu0 0.0
      %1508 = vmatprep.subr.mxu0 0.0
      %1509 = vmatpush2.msra.mxu0 0.0
      %1510 = vmatprep.subr.mxu0 0.0
      %1511 = vmatpush2.msra.mxu0 0.0
      %1512 = vmatprep.subr.mxu0 0.0
      %1513 = vmatpush2.msra.mxu0 0.0
      %1514 = vmatprep.subr.mxu0 0.0
      %1515 = vmatpush2.msra.mxu0 0.0
      %1516 = vmatprep.mubr.f32.mxu0 0.0
      %1517 = vmatmul.mubr.f32.gmra.mxu0 %v1450
      %v1518 = vpop.f32.mrf.mxu0
      %v1519 = vadd.f32 0.0, %v1518
      %v1520 = vpop.f32.mrf.mxu0
      %1521 = vdwg.mxu0
      %v1523 = vrot.slane %v1519, 4
      %v1524 = vrot.slane %v1519, 5
      %v1527 = vadd.f32 %v874, %v1523
      %v1528 = vadd.f32 %v875, %v1524
      %v1529 = vxor.u32 %v1527, 2147483648
      %v1530 = vxor.u32 %v1528, 2147483648
      %v1531 = vmul.f32 %v1529, 1.442695
      %v1532 = vpow.pop %v1531
      %v1533 = vmul.f32 %v1530, 1.442695
      %v1534 = vpow.pop %v1533
      %v1535 = vadd.f32 %v1532, 1.0
      %v1536 = vadd.f32 %v1534, 1.0
      %v1537 = vrcp.pop %v1535
      %v1538 = vmul.f32 1.0, %v1537
      %v1539 = vrcp.pop %v1536
      %v1540 = vmul.f32 1.0, %v1539
      %v1541 = vtanh.pop %v1527
      %v1542 = vtanh.pop %v1528
      %v1545 = vrot.slane %v1424, 7
      %v1546 = vrot.slane %v1425, 7
      %v1549 = vmul.f32 %v1538, %v1545
      %v1550 = vmul.f32 %v1540, %v1546
      %1553 = vrot.lane.b32.xlu0 %v1541, 64
      %v1554 = vpop.permute.xlu0 %1553
      %1555 = vrot.lane.b32.xlu0 %v1542, 64
      %v1556 = vpop.permute.xlu0 %1555
      %v1559 = vmul.f32 %v1538, %v1554
      %v1560 = vmul.f32 %v1540, %v1556
      %1563 = vrot.lane.b32.xlu0 %v1559, 32
      %v1564 = vpop.permute.xlu0 %1563
      %1565 = vrot.lane.b32.xlu0 %v1560, 32
      %v1566 = vpop.permute.xlu0 %1565
      %v1569 = vadd.f32 %v1549, %v1564
      %v1570 = vadd.f32 %v1550, %v1566
      %v1571 = vtanh.pop %v1569
      %v1572 = vtanh.pop %v1570
      %1575 = vrot.lane.b32.xlu0 %v1571, 64
      %v1576 = vpop.permute.xlu0 %1575
      %1577 = vrot.lane.b32.xlu0 %v1572, 64
      %v1578 = vpop.permute.xlu0 %1577
      %v1581 = vmul.f32 %v1538, %v1576
      %v1582 = vmul.f32 %v1540, %v1578
      %v1585 = vrot.slane %v1581, 4
      %v1586 = vrot.slane %v1582, 4
      %v1589 = vadd.f32 %v1444, %v1585
      %v1590 = vadd.f32 %v1445, %v1586
      %v1591 = vrot.slane %v1582, 3
      %v1592 = vsel %vm1013, %v1591, %v1585
      %1593 = vrot.lane.b32.xlu0 %v1592, 32
      %v1594 = vpop.permute.xlu0 %1593
      %v1595 = vsel %vm880, %v1594, 0
      %1597 = vmatprep.subr.mxu0 0.0
      %1598 = vmatpush1.msra.mxu0 0.0
      %1599 = vmatprep.subr.mxu0 0.0
      %1600 = vmatpush1.msra.mxu0 0.0
      %1601 = vmatprep.subr.mxu0 0.0
      %1602 = vmatpush1.msra.mxu0 0.0
      %1603 = vmatprep.subr.mxu0 0.0
      %1604 = vmatpush1.msra.mxu0 0.0
      %1605 = vmatprep.subr.mxu0 0.0
      %1606 = vmatpush1.msra.mxu0 0.0
      %1607 = vmatprep.subr.mxu0 0.0
      %1608 = vmatpush1.msra.mxu0 0.0
      %1609 = vmatprep.subr.mxu0 0.0
      %1610 = vmatpush1.msra.mxu0 0.0
      %1611 = vmatprep.subr.mxu0 0.0
      %1612 = vmatpush1.msra.mxu0 0.0
      %1613 = vmatprep.subr.mxu0 0.0
      %1614 = vmatpush1.msra.mxu0 0.0
      %1615 = vmatprep.subr.mxu0 0.0
      %1616 = vmatpush1.msra.mxu0 0.0
      %1617 = vmatprep.subr.mxu0 0.0
      %1618 = vmatpush1.msra.mxu0 0.0
      %1619 = vmatprep.subr.mxu0 0.0
      %1620 = vmatpush1.msra.mxu0 0.0
      %1621 = vmatprep.subr.mxu0 0.0
      %1622 = vmatpush1.msra.mxu0 %v879
      %1623 = vmatprep.subr.mxu0 0.0
      %1624 = vmatpush1.msra.mxu0 %v878
      %1625 = vmatprep.subr.mxu0 0.0
      %1626 = vmatpush1.msra.mxu0 %v877
      %1627 = vmatprep.subr.mxu0 0.0
      %1628 = vmatpush1.msra.mxu0 %v876
      %1629 = vmatprep.subr.mxu0 0.0
      %1630 = vmatpush2.msra.mxu0 0.0
      %1631 = vmatprep.subr.mxu0 0.0
      %1632 = vmatpush2.msra.mxu0 0.0
      %1633 = vmatprep.subr.mxu0 0.0
      %1634 = vmatpush2.msra.mxu0 0.0
      %1635 = vmatprep.subr.mxu0 0.0
      %1636 = vmatpush2.msra.mxu0 0.0
      %1637 = vmatprep.subr.mxu0 0.0
      %1638 = vmatpush2.msra.mxu0 0.0
      %1639 = vmatprep.subr.mxu0 0.0
      %1640 = vmatpush2.msra.mxu0 0.0
      %1641 = vmatprep.subr.mxu0 0.0
      %1642 = vmatpush2.msra.mxu0 0.0
      %1643 = vmatprep.subr.mxu0 0.0
      %1644 = vmatpush2.msra.mxu0 0.0
      %1645 = vmatprep.subr.mxu0 0.0
      %1646 = vmatpush2.msra.mxu0 0.0
      %1647 = vmatprep.subr.mxu0 0.0
      %1648 = vmatpush2.msra.mxu0 0.0
      %1649 = vmatprep.subr.mxu0 0.0
      %1650 = vmatpush2.msra.mxu0 0.0
      %1651 = vmatprep.subr.mxu0 0.0
      %1652 = vmatpush2.msra.mxu0 0.0
      %1653 = vmatprep.subr.mxu0 0.0
      %1654 = vmatpush2.msra.mxu0 0.0
      %1655 = vmatprep.subr.mxu0 0.0
      %1656 = vmatpush2.msra.mxu0 0.0
      %1657 = vmatprep.subr.mxu0 0.0
      %1658 = vmatpush2.msra.mxu0 0.0
      %1659 = vmatprep.subr.mxu0 0.0
      %1660 = vmatpush2.msra.mxu0 0.0
      %1661 = vmatprep.mubr.f32.mxu0 0.0
      %1662 = vmatmul.mubr.f32.gmra.mxu0 %v1595
      %v1663 = vpop.f32.mrf.mxu0
      %v1664 = vadd.f32 0.0, %v1663
      %v1665 = vpop.f32.mrf.mxu0
      %1666 = vdwg.mxu0
      %v1668 = vrot.slane %v1664, 3
      %v1669 = vrot.slane %v1664, 4
      %v1672 = vadd.f32 %v874, %v1668
      %v1673 = vadd.f32 %v875, %v1669
      %v1674 = vxor.u32 %v1672, 2147483648
      %v1675 = vxor.u32 %v1673, 2147483648
      %v1676 = vmul.f32 %v1674, 1.442695
      %v1677 = vpow.pop %v1676
      %v1678 = vmul.f32 %v1675, 1.442695
      %v1679 = vpow.pop %v1678
      %v1680 = vadd.f32 %v1677, 1.0
      %v1681 = vadd.f32 %v1679, 1.0
      %v1682 = vrcp.pop %v1680
      %v1683 = vmul.f32 1.0, %v1682
      %v1684 = vrcp.pop %v1681
      %v1685 = vmul.f32 1.0, %v1684
      %v1686 = vtanh.pop %v1672
      %v1687 = vtanh.pop %v1673
      %v1690 = vrot.slane %v1569, 7
      %v1691 = vrot.slane %v1570, 7
      %v1694 = vmul.f32 %v1683, %v1690
      %v1695 = vmul.f32 %v1685, %v1691
      %1698 = vrot.lane.b32.xlu0 %v1686, 64
      %v1699 = vpop.permute.xlu0 %1698
      %1700 = vrot.lane.b32.xlu0 %v1687, 64
      %v1701 = vpop.permute.xlu0 %1700
      %v1704 = vmul.f32 %v1683, %v1699
      %v1705 = vmul.f32 %v1685, %v1701
      %1708 = vrot.lane.b32.xlu0 %v1704, 32
      %v1709 = vpop.permute.xlu0 %1708
      %1710 = vrot.lane.b32.xlu0 %v1705, 32
      %v1711 = vpop.permute.xlu0 %1710
      %v1714 = vadd.f32 %v1694, %v1709
      %v1715 = vadd.f32 %v1695, %v1711
      %v1716 = vtanh.pop %v1714
      %v1717 = vtanh.pop %v1715
      %1720 = vrot.lane.b32.xlu0 %v1716, 64
      %v1721 = vpop.permute.xlu0 %1720
      %1722 = vrot.lane.b32.xlu0 %v1717, 64
      %v1723 = vpop.permute.xlu0 %1722
      %v1726 = vmul.f32 %v1683, %v1721
      %v1727 = vmul.f32 %v1685, %v1723
      %v1730 = vrot.slane %v1726, 5
      %v1731 = vrot.slane %v1727, 5
      %v1734 = vadd.f32 %v1589, %v1730
      %v1735 = vadd.f32 %v1590, %v1731
      %v1736 = vrot.slane %v1727, 4
      %v1737 = vsel %vm1013, %v1736, %v1730
      %1738 = vrot.lane.b32.xlu0 %v1737, 32
      %v1739 = vpop.permute.xlu0 %1738
      %v1740 = vsel %vm880, %v1739, 0
      %1742 = vmatprep.subr.mxu0 0.0
      %1743 = vmatpush1.msra.mxu0 0.0
      %1744 = vmatprep.subr.mxu0 0.0
      %1745 = vmatpush1.msra.mxu0 0.0
      %1746 = vmatprep.subr.mxu0 0.0
      %1747 = vmatpush1.msra.mxu0 0.0
      %1748 = vmatprep.subr.mxu0 0.0
      %1749 = vmatpush1.msra.mxu0 0.0
      %1750 = vmatprep.subr.mxu0 0.0
      %1751 = vmatpush1.msra.mxu0 0.0
      %1752 = vmatprep.subr.mxu0 0.0
      %1753 = vmatpush1.msra.mxu0 0.0
      %1754 = vmatprep.subr.mxu0 0.0
      %1755 = vmatpush1.msra.mxu0 0.0
      %1756 = vmatprep.subr.mxu0 0.0
      %1757 = vmatpush1.msra.mxu0 0.0
      %1758 = vmatprep.subr.mxu0 0.0
      %1759 = vmatpush1.msra.mxu0 0.0
      %1760 = vmatprep.subr.mxu0 0.0
      %1761 = vmatpush1.msra.mxu0 0.0
      %1762 = vmatprep.subr.mxu0 0.0
      %1763 = vmatpush1.msra.mxu0 0.0
      %1764 = vmatprep.subr.mxu0 0.0
      %1765 = vmatpush1.msra.mxu0 0.0
      %1766 = vmatprep.subr.mxu0 0.0
      %1767 = vmatpush1.msra.mxu0 %v879
      %1768 = vmatprep.subr.mxu0 0.0
      %1769 = vmatpush1.msra.mxu0 %v878
      %1770 = vmatprep.subr.mxu0 0.0
      %1771 = vmatpush1.msra.mxu0 %v877
      %1772 = vmatprep.subr.mxu0 0.0
      %1773 = vmatpush1.msra.mxu0 %v876
      %1774 = vmatprep.subr.mxu0 0.0
      %1775 = vmatpush2.msra.mxu0 0.0
      %1776 = vmatprep.subr.mxu0 0.0
      %1777 = vmatpush2.msra.mxu0 0.0
      %1778 = vmatprep.subr.mxu0 0.0
      %1779 = vmatpush2.msra.mxu0 0.0
      %1780 = vmatprep.subr.mxu0 0.0
      %1781 = vmatpush2.msra.mxu0 0.0
      %1782 = vmatprep.subr.mxu0 0.0
      %1783 = vmatpush2.msra.mxu0 0.0
      %1784 = vmatprep.subr.mxu0 0.0
      %1785 = vmatpush2.msra.mxu0 0.0
      %1786 = vmatprep.subr.mxu0 0.0
      %1787 = vmatpush2.msra.mxu0 0.0
      %1788 = vmatprep.subr.mxu0 0.0
      %1789 = vmatpush2.msra.mxu0 0.0
      %1790 = vmatprep.subr.mxu0 0.0
      %1791 = vmatpush2.msra.mxu0 0.0
      %1792 = vmatprep.subr.mxu0 0.0
      %1793 = vmatpush2.msra.mxu0 0.0
      %1794 = vmatprep.subr.mxu0 0.0
      %1795 = vmatpush2.msra.mxu0 0.0
      %1796 = vmatprep.subr.mxu0 0.0
      %1797 = vmatpush2.msra.mxu0 0.0
      %1798 = vmatprep.subr.mxu0 0.0
      %1799 = vmatpush2.msra.mxu0 0.0
      %1800 = vmatprep.subr.mxu0 0.0
      %1801 = vmatpush2.msra.mxu0 0.0
      %1802 = vmatprep.subr.mxu0 0.0
      %1803 = vmatpush2.msra.mxu0 0.0
      %1804 = vmatprep.subr.mxu0 0.0
      %1805 = vmatpush2.msra.mxu0 0.0
      %1806 = vmatprep.mubr.f32.mxu0 0.0
      %1807 = vmatmul.mubr.f32.gmra.mxu0 %v1740
      %v1808 = vpop.f32.mrf.mxu0
      %v1809 = vadd.f32 0.0, %v1808
      %v1810 = vpop.f32.mrf.mxu0
      %1811 = vdwg.mxu0
      %v1813 = vrot.slane %v1809, 2
      %v1814 = vrot.slane %v1809, 3
      %v1817 = vadd.f32 %v874, %v1813
      %v1818 = vadd.f32 %v875, %v1814
      %v1819 = vxor.u32 %v1817, 2147483648
      %v1820 = vxor.u32 %v1818, 2147483648
      %v1821 = vmul.f32 %v1819, 1.442695
      %v1822 = vpow.pop %v1821
      %v1823 = vmul.f32 %v1820, 1.442695
      %v1824 = vpow.pop %v1823
      %v1825 = vadd.f32 %v1822, 1.0
      %v1826 = vadd.f32 %v1824, 1.0
      %v1827 = vrcp.pop %v1825
      %v1828 = vmul.f32 1.0, %v1827
      %v1829 = vrcp.pop %v1826
      %v1830 = vmul.f32 1.0, %v1829
      %v1831 = vtanh.pop %v1817
      %v1832 = vtanh.pop %v1818
      %v1835 = vrot.slane %v1714, 7
      %v1836 = vrot.slane %v1715, 7
      %v1839 = vmul.f32 %v1828, %v1835
      %v1840 = vmul.f32 %v1830, %v1836
      %1843 = vrot.lane.b32.xlu0 %v1831, 64
      %v1844 = vpop.permute.xlu0 %1843
      %1845 = vrot.lane.b32.xlu0 %v1832, 64
      %v1846 = vpop.permute.xlu0 %1845
      %v1849 = vmul.f32 %v1828, %v1844
      %v1850 = vmul.f32 %v1830, %v1846
      %1853 = vrot.lane.b32.xlu0 %v1849, 32
      %v1854 = vpop.permute.xlu0 %1853
      %1855 = vrot.lane.b32.xlu0 %v1850, 32
      %v1856 = vpop.permute.xlu0 %1855
      %v1859 = vadd.f32 %v1839, %v1854
      %v1860 = vadd.f32 %v1840, %v1856
      %v1861 = vtanh.pop %v1859
      %v1862 = vtanh.pop %v1860
      %1865 = vrot.lane.b32.xlu0 %v1861, 64
      %v1866 = vpop.permute.xlu0 %1865
      %1867 = vrot.lane.b32.xlu0 %v1862, 64
      %v1868 = vpop.permute.xlu0 %1867
      %v1871 = vmul.f32 %v1828, %v1866
      %v1872 = vmul.f32 %v1830, %v1868
      %v1875 = vrot.slane %v1871, 6
      %v1876 = vrot.slane %v1872, 6
      %v1879 = vadd.f32 %v1734, %v1875
      %v1880 = vadd.f32 %v1735, %v1876
      %v1881 = vrot.slane %v1872, 5
      %v1882 = vsel %vm1013, %v1881, %v1875
      %1883 = vrot.lane.b32.xlu0 %v1882, 32
      %v1884 = vpop.permute.xlu0 %1883
      %v1885 = vsel %vm880, %v1884, 0
      %1887 = vmatprep.subr.mxu0 0.0
      %1888 = vmatpush1.msra.mxu0 0.0
      %1889 = vmatprep.subr.mxu0 0.0
      %1890 = vmatpush1.msra.mxu0 0.0
      %1891 = vmatprep.subr.mxu0 0.0
      %1892 = vmatpush1.msra.mxu0 0.0
      %1893 = vmatprep.subr.mxu0 0.0
      %1894 = vmatpush1.msra.mxu0 0.0
      %1895 = vmatprep.subr.mxu0 0.0
      %1896 = vmatpush1.msra.mxu0 0.0
      %1897 = vmatprep.subr.mxu0 0.0
      %1898 = vmatpush1.msra.mxu0 0.0
      %1899 = vmatprep.subr.mxu0 0.0
      %1900 = vmatpush1.msra.mxu0 0.0
      %1901 = vmatprep.subr.mxu0 0.0
      %1902 = vmatpush1.msra.mxu0 0.0
      %1903 = vmatprep.subr.mxu0 0.0
      %1904 = vmatpush1.msra.mxu0 0.0
      %1905 = vmatprep.subr.mxu0 0.0
      %1906 = vmatpush1.msra.mxu0 0.0
      %1907 = vmatprep.subr.mxu0 0.0
      %1908 = vmatpush1.msra.mxu0 0.0
      %1909 = vmatprep.subr.mxu0 0.0
      %1910 = vmatpush1.msra.mxu0 0.0
      %1911 = vmatprep.subr.mxu0 0.0
      %1912 = vmatpush1.msra.mxu0 %v879
      %1913 = vmatprep.subr.mxu0 0.0
      %1914 = vmatpush1.msra.mxu0 %v878
      %1915 = vmatprep.subr.mxu0 0.0
      %1916 = vmatpush1.msra.mxu0 %v877
      %1917 = vmatprep.subr.mxu0 0.0
      %1918 = vmatpush1.msra.mxu0 %v876
      %1919 = vmatprep.subr.mxu0 0.0
      %1920 = vmatpush2.msra.mxu0 0.0
      %1921 = vmatprep.subr.mxu0 0.0
      %1922 = vmatpush2.msra.mxu0 0.0
      %1923 = vmatprep.subr.mxu0 0.0
      %1924 = vmatpush2.msra.mxu0 0.0
      %1925 = vmatprep.subr.mxu0 0.0
      %1926 = vmatpush2.msra.mxu0 0.0
      %1927 = vmatprep.subr.mxu0 0.0
      %1928 = vmatpush2.msra.mxu0 0.0
      %1929 = vmatprep.subr.mxu0 0.0
      %1930 = vmatpush2.msra.mxu0 0.0
      %1931 = vmatprep.subr.mxu0 0.0
      %1932 = vmatpush2.msra.mxu0 0.0
      %1933 = vmatprep.subr.mxu0 0.0
      %1934 = vmatpush2.msra.mxu0 0.0
      %1935 = vmatprep.subr.mxu0 0.0
      %1936 = vmatpush2.msra.mxu0 0.0
      %1937 = vmatprep.subr.mxu0 0.0
      %1938 = vmatpush2.msra.mxu0 0.0
      %1939 = vmatprep.subr.mxu0 0.0
      %1940 = vmatpush2.msra.mxu0 0.0
      %1941 = vmatprep.subr.mxu0 0.0
      %1942 = vmatpush2.msra.mxu0 0.0
      %1943 = vmatprep.subr.mxu0 0.0
      %1944 = vmatpush2.msra.mxu0 0.0
      %1945 = vmatprep.subr.mxu0 0.0
      %1946 = vmatpush2.msra.mxu0 0.0
      %1947 = vmatprep.subr.mxu0 0.0
      %1948 = vmatpush2.msra.mxu0 0.0
      %1949 = vmatprep.subr.mxu0 0.0
      %1950 = vmatpush2.msra.mxu0 0.0
      %1951 = vmatprep.mubr.f32.mxu0 0.0
      %1952 = vmatmul.mubr.f32.gmra.mxu0 %v1885
      %v1953 = vpop.f32.mrf.mxu0
      %v1954 = vadd.f32 0.0, %v1953
      %v1955 = vpop.f32.mrf.mxu0
      %1956 = vdwg.mxu0
      %v1958 = vrot.slane %v1954, 1
      %v1959 = vrot.slane %v1954, 2
      %v1962 = vadd.f32 %v874, %v1958
      %v1963 = vadd.f32 %v875, %v1959
      %v1964 = vxor.u32 %v1962, 2147483648
      %v1965 = vxor.u32 %v1963, 2147483648
      %v1966 = vmul.f32 %v1964, 1.442695
      %v1967 = vpow.pop %v1966
      %v1968 = vmul.f32 %v1965, 1.442695
      %v1969 = vpow.pop %v1968
      %v1970 = vadd.f32 %v1967, 1.0
      %v1971 = vadd.f32 %v1969, 1.0
      %v1972 = vrcp.pop %v1970
      %v1973 = vmul.f32 1.0, %v1972
      %v1974 = vrcp.pop %v1971
      %v1975 = vmul.f32 1.0, %v1974
      %v1976 = vtanh.pop %v1962
      %v1977 = vtanh.pop %v1963
      %v1980 = vrot.slane %v1859, 7
      %v1981 = vrot.slane %v1860, 7
      %v1984 = vmul.f32 %v1973, %v1980
      %v1985 = vmul.f32 %v1975, %v1981
      %1988 = vrot.lane.b32.xlu0 %v1976, 64
      %v1989 = vpop.permute.xlu0 %1988
      %1990 = vrot.lane.b32.xlu0 %v1977, 64
      %v1991 = vpop.permute.xlu0 %1990
      %v1994 = vmul.f32 %v1973, %v1989
      %v1995 = vmul.f32 %v1975, %v1991
      %1998 = vrot.lane.b32.xlu0 %v1994, 32
      %v1999 = vpop.permute.xlu0 %1998
      %2000 = vrot.lane.b32.xlu0 %v1995, 32
      %v2001 = vpop.permute.xlu0 %2000
      %v2004 = vadd.f32 %v1984, %v1999
      %v2005 = vadd.f32 %v1985, %v2001
      %v2006 = vtanh.pop %v2004
      %v2007 = vtanh.pop %v2005
      %2010 = vrot.lane.b32.xlu0 %v2006, 64
      %v2011 = vpop.permute.xlu0 %2010
      %2012 = vrot.lane.b32.xlu0 %v2007, 64
      %v2013 = vpop.permute.xlu0 %2012
      %v2016 = vmul.f32 %v1973, %v2011
      %v2017 = vmul.f32 %v1975, %v2013
      %v2020 = vrot.slane %v2016, 7
      %v2021 = vrot.slane %v2017, 7
      %v2024 = vadd.f32 %v1879, %v2020
      %v2025 = vadd.f32 %v1880, %v2021
      %v2026 = vmul.f32 %v2024, 0.125
      %v2027 = vmul.f32 %v2025, 0.125
      %v2030 = vrot.slane %v2027, 7
      %v2031 = vsel %vm1013, %v2030, %v2026
      %2032 = vrot.lane.b32.xlu0 %v2031, 32
      %v2033 = vpop.permute.xlu0 %2032
      %vm2035 = vcmask 254976
      %v2036 = vsel %vm2035, %v2033, 0.0
      %2037 = vadd.xlane.f32.xlu0 %v2036
      %v2038 = vpop.xlane.xlu0 %2037
      %v2039 = vrcp.pop 32.0
      %v2040 = vmul.f32 %v2038, %v2039
      %v2042 = vrot.slane %v2040, 1
      %v2045 = vsub.f32 %v2026, %v2040
      %v2046 = vsub.f32 %v2027, %v2042
      %v2047 = vmul.f32 %v2045, %v2045
      %v2048 = vmul.f32 %v2046, %v2046
      %v2051 = vrot.slane %v2048, 7
      %v2052 = vsel %vm1013, %v2051, %v2047
      %2053 = vrot.lane.b32.xlu0 %v2052, 32
      %v2054 = vpop.permute.xlu0 %2053
      %v2056 = vsel %vm2035, %v2054, 0.0
      %2057 = vadd.xlane.f32.xlu0 %v2056
      %v2058 = vpop.xlane.xlu0 %2057
      %v2059 = vmul.f32 %v2058, %v2039
      %v2060 = vadd.f32 %v2059, 1e-05
      %v2061 = vrsqrt.pop %v2060
      %v2063 = vrot.slane %v2061, 1
      %v2066 = vmul.f32 %v2045, %v2061
      %v2067 = vmul.f32 %v2046, %v2063
      %v2068 = vld [vmem:[%s6] sm:$0x1]
      %v2070 = vlaneseq
      %v2071 = vshrl.u32 %v2070, 7
      %v2072 = vsub.s32 0, %v2071
      %v2073 = vrot.slane %v2068, %v2072
      %2074 = vrot.lane.b32.xlu0 %v2073, 96
      %v2075 = vpop.permute.xlu0 %2074
      %v2077 = vmul.f32 %v2066, %v2075
      %v2078 = vmul.f32 %v2067, %v2075
      %v2079 = vld [vmem:[%s7] sm:$0x1]
      %v2081 = vlaneseq
      %v2082 = vshrl.u32 %v2081, 7
      %v2083 = vsub.s32 0, %v2082
      %v2084 = vrot.slane %v2079, %v2083
      %2085 = vrot.lane.b32.xlu0 %v2084, 96
      %v2086 = vpop.permute.xlu0 %2085
      %v2088 = vadd.f32 %v2077, %v2086
      %v2089 = vadd.f32 %v2078, %v2086
      %vm2090 = vcmp.ge.f32.partialorder %v2088, 0.0
      %vm2091 = vcmp.ge.f32.partialorder %v2089, 0.0
      %v2092 = vmul.f32 %v2088, 0.01
      %v2093 = vmul.f32 %v2089, 0.01
      %v2094 = vsel %vm2090, %v2088, %v2092
      %v2095 = vsel %vm2091, %v2089, %v2093
      %v2096 = vld [vmem:[%s8] sm:$0xff]
      %v2097 = vld [vmem:[%s8 + $0x8] sm:$0xff]
      %v2098 = vld [vmem:[%s8 + $0x10] sm:$0xff]
      %v2099 = vld [vmem:[%s8 + $0x18] sm:$0xff]
      %v2100 = vld [vmem:[%s9] sm:$0x1]
      %v2102 = vlaneseq
      %v2103 = vshrl.u32 %v2102, 7
      %v2104 = vsub.s32 0, %v2103
      %v2105 = vrot.slane %v2100, %v2104
      %v2109 = vrot.slane %v2095, 7
      %v2110 = vsel %vm1013, %v2109, %v2094
      %2111 = vrot.lane.b32.xlu0 %v2110, 32
      %v2112 = vpop.permute.xlu0 %2111
      %v2113 = vsel %vm880, %v2112, 0
      %2115 = vmatprep.subr.mxu0 0.0
      %2116 = vmatpush1.msra.mxu0 0.0
      %2117 = vmatprep.subr.mxu0 0.0
      %2118 = vmatpush1.msra.mxu0 0.0
      %2119 = vmatprep.subr.mxu0 0.0
      %2120 = vmatpush1.msra.mxu0 0.0
      %2121 = vmatprep.subr.mxu0 0.0
      %2122 = vmatpush1.msra.mxu0 0.0
      %2123 = vmatprep.subr.mxu0 0.0
      %2124 = vmatpush1.msra.mxu0 0.0
      %2125 = vmatprep.subr.mxu0 0.0
      %2126 = vmatpush1.msra.mxu0 0.0
      %2127 = vmatprep.subr.mxu0 0.0
      %2128 = vmatpush1.msra.mxu0 0.0
      %2129 = vmatprep.subr.mxu0 0.0
      %2130 = vmatpush1.msra.mxu0 0.0
      %2131 = vmatprep.subr.mxu0 0.0
      %2132 = vmatpush1.msra.mxu0 0.0
      %2133 = vmatprep.subr.mxu0 0.0
      %2134 = vmatpush1.msra.mxu0 0.0
      %2135 = vmatprep.subr.mxu0 0.0
      %2136 = vmatpush1.msra.mxu0 0.0
      %2137 = vmatprep.subr.mxu0 0.0
      %2138 = vmatpush1.msra.mxu0 0.0
      %2139 = vmatprep.subr.mxu0 0.0
      %2140 = vmatpush1.msra.mxu0 %v2099
      %2141 = vmatprep.subr.mxu0 0.0
      %2142 = vmatpush1.msra.mxu0 %v2098
      %2143 = vmatprep.subr.mxu0 0.0
      %2144 = vmatpush1.msra.mxu0 %v2097
      %2145 = vmatprep.subr.mxu0 0.0
      %2146 = vmatpush1.msra.mxu0 %v2096
      %2147 = vmatprep.subr.mxu0 0.0
      %2148 = vmatpush2.msra.mxu0 0.0
      %2149 = vmatprep.subr.mxu0 0.0
      %2150 = vmatpush2.msra.mxu0 0.0
      %2151 = vmatprep.subr.mxu0 0.0
      %2152 = vmatpush2.msra.mxu0 0.0
      %2153 = vmatprep.subr.mxu0 0.0
      %2154 = vmatpush2.msra.mxu0 0.0
      %2155 = vmatprep.subr.mxu0 0.0
      %2156 = vmatpush2.msra.mxu0 0.0
      %2157 = vmatprep.subr.mxu0 0.0
      %2158 = vmatpush2.msra.mxu0 0.0
      %2159 = vmatprep.subr.mxu0 0.0
      %2160 = vmatpush2.msra.mxu0 0.0
      %2161 = vmatprep.subr.mxu0 0.0
      %2162 = vmatpush2.msra.mxu0 0.0
      %2163 = vmatprep.subr.mxu0 0.0
      %2164 = vmatpush2.msra.mxu0 0.0
      %2165 = vmatprep.subr.mxu0 0.0
      %2166 = vmatpush2.msra.mxu0 0.0
      %2167 = vmatprep.subr.mxu0 0.0
      %2168 = vmatpush2.msra.mxu0 0.0
      %2169 = vmatprep.subr.mxu0 0.0
      %2170 = vmatpush2.msra.mxu0 0.0
      %2171 = vmatprep.subr.mxu0 0.0
      %2172 = vmatpush2.msra.mxu0 0.0
      %2173 = vmatprep.subr.mxu0 0.0
      %2174 = vmatpush2.msra.mxu0 0.0
      %2175 = vmatprep.subr.mxu0 0.0
      %2176 = vmatpush2.msra.mxu0 0.0
      %2177 = vmatprep.subr.mxu0 0.0
      %2178 = vmatpush2.msra.mxu0 0.0
      %2179 = vmatprep.mubr.f32.mxu0 0.0
      %2180 = vmatmul.mubr.f32.gmra.mxu0 %v2113
      %v2181 = vpop.f32.mrf.mxu0
      %v2182 = vadd.f32 %v2105, %v2181
      %v2183 = vpop.f32.mrf.mxu0
      %2184 = vdwg.mxu0
      %vm2185 = vcmask 9216
      %2186 = vst.msk [vmem:[#allocation3] sm:$0x3] %vm2185, %v2182
    $region45: #{face_classifier_lstm.1} parent=1 // pred_fallthru
      _
    // Predicated region
    $region46: #{face_classifier_lstm.1} parent=1 // pred_check
      _
    $region47: #{face_classifier_lstm.1} parent=1 // pred_check_branch
      %2188 = sbr.rel (0) target = $region49
    $region48: #{face_classifier_lstm.1} parent=1 // pred_region
      %s2190 = ssub.s32 32, 32
      %2191 = vsyncadd [#allocation4], %s2190
      %s2193 = sshll.u32 [#allocation3], 4
      %s2194 = int_to_ptr.vmem [resolvable:$true] %s2193
      %2196 = dma.vmem_to_hbm [thread:$0]  %s2194, 32, %s10, [#allocation4]
    $region49: #{face_classifier_lstm.1} parent=1 // pred_fallthru
      _
    // Predicated region
    $region50: #{face_classifier_lstm.1} parent=1 // pred_check
      _
    $region51: #{face_classifier_lstm.1} parent=1 // pred_check_branch
      %2198 = sbr.rel (0) target = $region53
    $region52: #{face_classifier_lstm.1} parent=1 // pred_region
      %2199 = dma.done [#allocation4], 32
    $region53: #{face_classifier_lstm.1} parent=1 // pred_fallthru
      _
    %2200 = vsyncpa [#allocation4], 1

</llo_original>
